<compile_context>
chip_gen: v5e
topology: v5e:2x2
jax: 0.10.0
libtpu: 0.0.40
codegen_flags: <defaults>
</compile_context>

<pallas_src>
import jax
import jax.numpy as jnp
from jax import lax
from jax.experimental import pallas as pl
from jax.experimental.pallas import tpu as pltpu

# ------------- small test config (real model: n_embd=384, n_head=6, block_size=256,
# ------------- n_layer=6, vocab~=65; reduced here but same structure) --------------
B = 2            # batch
T = 16           # sequence length (block_size for the test)
C = 128          # n_embd
H = 4            # n_head
D = C // H       # head dim
FF = 4 * C       # ffwd hidden
N_LAYER = 2      # number of transformer blocks
VOCAB = 65       # tinyshakespeare-like vocab
VOCAB_PAD = 128  # lane-dense padded vocab for the lm_head matmul
LN_EPS = 1e-5
NEG_INF = -1e30
BT = B * T       # flattened rows
R = H * BT       # stacked attention rows (head-major: r = h*BT + b*T + t)


def _layernorm(x, g, b):
    mu = jnp.mean(x, axis=-1, keepdims=True)
    var = jnp.mean((x - mu) * (x - mu), axis=-1, keepdims=True)
    return (x - mu) * lax.rsqrt(var + LN_EPS) * g + b


# --------------------- fused all-layers + head kernel (grid over layers) -------------
def fused_kernel(x0_ref, bias_ref,
                 ln1_g_ref, ln1_b_ref, w_attn_ref, w_proj_ref,
                 ln2_g_ref, ln2_b_ref, w1_ref, b1_ref, w2_ref, b2_ref,
                 lnf_g_ref, lnf_b_ref, wh_ref, bh_ref,
                 o_ref, x_carry):
    l = pl.program_id(0)

    @pl.when(l == 0)
    def _():
        x_carry[...] = x0_ref[...]

    x = x_carry[...]                                               # (BT, C)

    # ---------------- causal self-attention branch ----------------
    xn = _layernorm(x, ln1_g_ref[0], ln1_b_ref[0])                 # (BT, C)
    # one fused QKV matmul: (32,128) x (128,384)
    qkv = jnp.dot(xn, w_attn_ref[0], preferred_element_type=jnp.float32)
    q_all = qkv[:, 0:C]
    k_all = qkv[:, C:2 * C]
    v_all = qkv[:, 2 * C:3 * C]

    def to_head_major(a):
        # (BT, H*D) -> (H*BT, D); rows [h*BT:(h+1)*BT] hold head h in (b, t) order.
        return jnp.concatenate([a[:, h * D:(h + 1) * D] for h in range(H)], axis=0)

    qh = to_head_major(q_all)                                      # (R, D) = (128, 32)
    kh = to_head_major(k_all)
    vh = to_head_major(v_all)

    # One block-diagonal score matmul, contracting last dims (no explicit k.T).
    s = lax.dot_general(qh, kh, (((1,), (1,)), ((), ())),
                        preferred_element_type=jnp.float32) * (1.0 / (D ** 0.5))
    s = s + bias_ref[...]                                          # precomputed mask bias

    m = jnp.max(s, axis=-1, keepdims=True)
    p = jnp.exp(s - m)
    p = p * pl.reciprocal(jnp.sum(p, axis=-1, keepdims=True), approx=True)
    y = jnp.dot(p, vh, preferred_element_type=jnp.float32)         # (R, D)

    # relayout back to (BT, H*D) once, then ONE output-projection matmul.
    ycat = jnp.concatenate([y[h * BT:(h + 1) * BT, :] for h in range(H)], axis=1)
    x1 = x + jnp.dot(ycat, w_proj_ref[0], preferred_element_type=jnp.float32)

    # ---------------- feed-forward branch ----------------
    xn2 = _layernorm(x1, ln2_g_ref[0], ln2_b_ref[0])               # (BT, C)
    hdn = jnp.dot(xn2, w1_ref[0], preferred_element_type=jnp.float32) + b1_ref[0]
    hdn = jax.nn.gelu(hdn, approximate=True)
    x2 = x1 + jnp.dot(hdn, w2_ref[0], preferred_element_type=jnp.float32) + b2_ref[0]

    x_carry[...] = x2

    # ---------------- final LayerNorm + lm_head at the last layer ----------------
    @pl.when(l == pl.num_programs(0) - 1)
    def _():
        xf = _layernorm(x2, lnf_g_ref[...], lnf_b_ref[...])
        o_ref[...] = jnp.dot(xf, wh_ref[...],
                             preferred_element_type=jnp.float32) + bh_ref[...]


def _const_spec(shape):
    # whole array, same block every grid step (fetched once, stays VMEM-resident)
    return pl.BlockSpec(shape, lambda l: (0, 0))


def _layer_spec(shape):
    # per-layer slab streamed along the layer grid axis (auto double-buffered)
    return pl.BlockSpec((1,) + shape, lambda l: (l, 0, 0))


def fused_forward(x2d, packed_weights):
    (mask_bias, ln1_g, ln1_b, w_attn, w_proj, ln2_g, ln2_b,
     w1, b1, w2, b2, lnf_g, lnf_b, w_head_pad, b_head_pad) = packed_weights

    in_specs = [
        _const_spec((BT, C)),            # x0
        _const_spec((R, R)),             # additive mask bias
        _layer_spec((1, C)),             # ln1_g
        _layer_spec((1, C)),             # ln1_b
        _layer_spec((C, 3 * C)),         # w_attn
        _layer_spec((C, C)),             # w_proj
        _layer_spec((1, C)),             # ln2_g
        _layer_spec((1, C)),             # ln2_b
        _layer_spec((C, FF)),            # w1
        _layer_spec((1, FF)),            # b1
        _layer_spec((FF, C)),            # w2
        _layer_spec((1, C)),             # b2
        _const_spec((1, C)),             # lnf_g
        _const_spec((1, C)),             # lnf_b
        _const_spec((C, VOCAB_PAD)),     # w_head (padded)
        _const_spec((1, VOCAB_PAD)),     # b_head (padded)
    ]
    out_specs = pl.BlockSpec((BT, VOCAB_PAD), lambda l: (0, 0))

    return pl.pallas_call(
        fused_kernel,
        out_shape=jax.ShapeDtypeStruct((BT, VOCAB_PAD), jnp.float32),
        grid=(N_LAYER,),
        in_specs=in_specs,
        out_specs=out_specs,
        scratch_shapes=[pltpu.VMEM((BT, C), jnp.float32)],   # activation carry
        compiler_params=pltpu.CompilerParams(dimension_semantics=("arbitrary",)),
    )(x2d, mask_bias, ln1_g, ln1_b, w_attn, w_proj, ln2_g, ln2_b,
      w1, b1, w2, b2, lnf_g, lnf_b, w_head_pad, b_head_pad)


# ------------------------------ param packing (once, at init) ------------------------
def pack_params(params):
    tok_table, pos_table, blocks, lnf_g, lnf_b, w_head, b_head = params
    stack = lambda i: jnp.stack([blk[i] for blk in blocks], axis=0)
    ln1_g, ln1_b = stack(0), stack(1)
    w_attn, w_proj = stack(2), stack(3)
    ln2_g, ln2_b = stack(4), stack(5)
    w1, b1, w2, b2 = stack(6), stack(7), stack(8), stack(9)

    w_head_pad = jnp.pad(w_head, ((0, 0), (0, VOCAB_PAD - VOCAB)))
    b_head_pad = jnp.pad(b_head, ((0, 0), (0, VOCAB_PAD - VOCAB)))

    # block-diagonal (same head & batch) + causal additive mask over stacked rows
    row = jnp.arange(R)[:, None]
    col = jnp.arange(R)[None, :]
    allowed = (row // T == col // T) & (row >= col)
    mask_bias = jnp.where(allowed, 0.0, NEG_INF).astype(jnp.float32)

    packed_weights = (mask_bias, ln1_g, ln1_b, w_attn, w_proj, ln2_g, ln2_b,
                      w1, b1, w2, b2, lnf_g, lnf_b, w_head_pad, b_head_pad)
    return (tok_table, pos_table, packed_weights)


# ------------------------------ full transformer forward ----------------------------
def transformer_forward(idx, packed):
    """idx: (B, T) int32 token ids -> logits (B, T, VOCAB) f32."""
    tok_table, pos_table, packed_weights = packed
    # TODO(synk): embedding gathers kept in plain JAX (no clean small-scale Pallas form).
    x = jnp.take(tok_table, idx, axis=0) + pos_table[:T][None, :, :]   # (B, T, C)
    x2 = x.reshape(BT, C)
    logits_pad = fused_forward(x2, packed_weights)                     # (BT, VOCAB_PAD)
    return logits_pad[:, :VOCAB].reshape(B, T, VOCAB)


# ---------------- pure-JAX reference (same math, for a sanity check) ----------------
def transformer_reference(idx, params):
    tok_table, pos_table, blocks, lnf_g, lnf_b, w_head, b_head = params

    def ln(v, g, b):
        mu = jnp.mean(v, axis=-1, keepdims=True)
        var = jnp.mean((v - mu) ** 2, axis=-1, keepdims=True)
        return (v - mu) * lax.rsqrt(var + LN_EPS) * g + b

    x = jnp.take(tok_table, idx, axis=0) + pos_table[:T][None, :, :]
    causal = jnp.tril(jnp.ones((T, T), dtype=bool))
    for (ln1_g, ln1_b, w_attn, w_proj, ln2_g, ln2_b, w1, b1, w2, b2) in blocks:
        xn = ln(x, ln1_g, ln1_b)
        qkv = xn @ w_attn
        q, k, v = jnp.split(qkv, 3, axis=-1)
        q = q.reshape(B, T, H, D).transpose(0, 2, 1, 3)
        k = k.reshape(B, T, H, D).transpose(0, 2, 1, 3)
        v = v.reshape(B, T, H, D).transpose(0, 2, 1, 3)
        s = jnp.einsum("bhtd,bhsd->bhts", q, k) / (D ** 0.5)
        s = jnp.where(causal, s, NEG_INF)
        p = jax.nn.softmax(s, axis=-1)
        y = jnp.einsum("bhts,bhsd->bhtd", p, v)
        y = y.transpose(0, 2, 1, 3).reshape(B, T, C)
        x = x + y @ w_proj
        xn2 = ln(x, ln2_g, ln2_b)
        x = x + jax.nn.gelu(xn2 @ w1 + b1, approximate=True) @ w2 + b2
    xf = ln(x, lnf_g, lnf_b)
    return xf @ w_head + b_head


def init_params(key):
    keys = jax.random.split(key, 4 + 6 * N_LAYER)
    u = lambda k, shape, fan_in: jax.random.uniform(
        k, shape, jnp.float32, -1.0 / (fan_in ** 0.5), 1.0 / (fan_in ** 0.5))
    tok_table = 0.1 * jax.random.normal(keys[0], (VOCAB, C), jnp.float32)
    pos_table = 0.1 * jax.random.normal(keys[1], (T, C), jnp.float32)
    blocks = []
    ki = 2
    for _ in range(N_LAYER):
        ks = keys[ki:ki + 6]
        ki += 6
        ln1_g = jnp.ones((1, C), jnp.float32)
        ln1_b = jnp.zeros((1, C), jnp.float32)
        ln2_g = jnp.ones((1, C), jnp.float32)
        ln2_b = jnp.zeros((1, C), jnp.float32)
        w_attn = u(ks[0], (C, 3 * C), C)       # stored (in, out); y = x @ W
        w_proj = u(ks[1], (C, C), C)
        w1 = u(ks[2], (C, FF), C)
        b1 = u(ks[3], (1, FF), C)
        w2 = u(ks[4], (FF, C), FF)
        b2 = u(ks[5], (1, C), FF)
        blocks.append((ln1_g, ln1_b, w_attn, w_proj, ln2_g, ln2_b, w1, b1, w2, b2))
    lnf_g = jnp.ones((1, C), jnp.float32)
    lnf_b = jnp.zeros((1, C), jnp.float32)
    w_head = u(keys[ki], (C, VOCAB), C)
    b_head = u(keys[ki + 1], (1, VOCAB), C)
    return (tok_table, pos_table, tuple(blocks), lnf_g, lnf_b, w_head, b_head)


if __name__ == "__main__":
    key = jax.random.PRNGKey(0)
    k_idx, k_p = jax.random.split(key)
    idx = jax.random.randint(k_idx, (B, T), 0, VOCAB, dtype=jnp.int32)
    params = init_params(k_p)
    packed = jax.block_until_ready(pack_params(params))   # one-time weight repacking

    fwd = jax.jit(transformer_forward)
    logits = jax.block_until_ready(fwd(idx, packed))

    ref = transformer_reference(idx, params)
    assert logits.shape == (B, T, VOCAB)
    max_err = float(jnp.max(jnp.abs(logits - ref)))
    # approx reciprocal in the in-kernel softmax => slightly loosened tolerance
    assert jnp.allclose(logits, ref, atol=2e-2, rtol=2e-2), max_err
    print("KERNEL_OK")
</pallas_src>

<mosaic_0001>
module attributes {stable_mosaic.version = 11 : i64} {
  func.func @fused_kernel(%arg0: i32, %arg1: memref<32x128xf32, #tpu.memory_space<vmem>>, %arg2: memref<128x128xf32, #tpu.memory_space<vmem>>, %arg3: memref<1x1x128xf32, #tpu.memory_space<vmem>>, %arg4: memref<1x1x128xf32, #tpu.memory_space<vmem>>, %arg5: memref<1x128x384xf32, #tpu.memory_space<vmem>>, %arg6: memref<1x128x128xf32, #tpu.memory_space<vmem>>, %arg7: memref<1x1x128xf32, #tpu.memory_space<vmem>>, %arg8: memref<1x1x128xf32, #tpu.memory_space<vmem>>, %arg9: memref<1x128x512xf32, #tpu.memory_space<vmem>>, %arg10: memref<1x1x512xf32, #tpu.memory_space<vmem>>, %arg11: memref<1x512x128xf32, #tpu.memory_space<vmem>>, %arg12: memref<1x1x128xf32, #tpu.memory_space<vmem>>, %arg13: memref<1x128xf32, #tpu.memory_space<vmem>>, %arg14: memref<1x128xf32, #tpu.memory_space<vmem>>, %arg15: memref<128x128xf32, #tpu.memory_space<vmem>>, %arg16: memref<1x128xf32, #tpu.memory_space<vmem>>, %arg17: memref<32x128xf32, #tpu.memory_space<vmem>>, %arg18: memref<32x128xf32, #tpu.memory_space<vmem>>) attributes {dimension_semantics = [#tpu.dimension_semantics<arbitrary>], iteration_bounds = array<i64: 2>, scalar_prefetch = 0 : i64, scratch_operands = 1 : i64, tpu.core_type = #tpu.core_type<tc>, window_params = [{pipeline_mode = #tpu.pipeline_mode<synchronous>, transform_indices = @transform_0, window_bounds = array<i64: 32, 128>}, {pipeline_mode = #tpu.pipeline_mode<synchronous>, transform_indices = @transform_1, window_bounds = array<i64: 128, 128>}, {transform_indices = @transform_2, window_bounds = array<i64: 1, 1, 128>}, {transform_indices = @transform_3, window_bounds = array<i64: 1, 1, 128>}, {transform_indices = @transform_4, window_bounds = array<i64: 1, 128, 384>}, {transform_indices = @transform_5, window_bounds = array<i64: 1, 128, 128>}, {transform_indices = @transform_6, window_bounds = array<i64: 1, 1, 128>}, {transform_indices = @transform_7, window_bounds = array<i64: 1, 1, 128>}, {transform_indices = @transform_8, window_bounds = array<i64: 1, 128, 512>}, {transform_indices = @transform_9, window_bounds = array<i64: 1, 1, 512>}, {transform_indices = @transform_10, window_bounds = array<i64: 1, 512, 128>}, {transform_indices = @transform_11, window_bounds = array<i64: 1, 1, 128>}, {pipeline_mode = #tpu.pipeline_mode<synchronous>, transform_indices = @transform_12, window_bounds = array<i64: 1, 128>}, {pipeline_mode = #tpu.pipeline_mode<synchronous>, transform_indices = @transform_13, window_bounds = array<i64: 1, 128>}, {pipeline_mode = #tpu.pipeline_mode<synchronous>, transform_indices = @transform_14, window_bounds = array<i64: 128, 128>}, {pipeline_mode = #tpu.pipeline_mode<synchronous>, transform_indices = @transform_15, window_bounds = array<i64: 1, 128>}, {pipeline_mode = #tpu.pipeline_mode<synchronous>, transform_indices = @transform_16, window_bounds = array<i64: 32, 128>}]} {
    %c0_i32 = arith.constant 0 : i32
    %0 = arith.cmpi eq, %arg0, %c0_i32 : i32
    %1 = arith.extui %0 : i1 to i32
    %c0_i32_0 = arith.constant 0 : i32
    %2 = arith.cmpi ne, %1, %c0_i32_0 : i32
    scf.if %2 {
      %c0_59 = arith.constant 0 : index
      %c0_60 = arith.constant 0 : index
      %138 = vector.load %arg1[%c0_59, %c0_60] : memref<32x128xf32, #tpu.memory_space<vmem>>, vector<32x128xf32>
      %c0_61 = arith.constant 0 : index
      %c0_62 = arith.constant 0 : index
      %139 = vector.load %arg18[%c0_61, %c0_62] : memref<32x128xf32, #tpu.memory_space<vmem>>, vector<32x128xf32>
      tpu.vector_store %arg18[%c0_61, %c0_62], %138 {strides = array<i32>} : memref<32x128xf32, #tpu.memory_space<vmem>>, vector<32x128xf32>,
    } else {
    }
    %c0 = arith.constant 0 : index
    %c0_1 = arith.constant 0 : index
    %3 = vector.load %arg18[%c0, %c0_1] : memref<32x128xf32, #tpu.memory_space<vmem>>, vector<32x128xf32>
    %c0_2 = arith.constant 0 : index
    %c0_3 = arith.constant 0 : index
    %c0_4 = arith.constant 0 : index
    %4 = vector.load %arg3[%c0_2, %c0_3, %c0_4] : memref<1x1x128xf32, #tpu.memory_space<vmem>>, vector<1x1x128xf32>
    %5 = vector.shape_cast %4 : vector<1x1x128xf32> to vector<1x128xf32>
    %c0_5 = arith.constant 0 : index
    %c0_6 = arith.constant 0 : index
    %c0_7 = arith.constant 0 : index
    %6 = vector.load %arg4[%c0_5, %c0_6, %c0_7] : memref<1x1x128xf32, #tpu.memory_space<vmem>>, vector<1x1x128xf32>
    %7 = vector.shape_cast %6 : vector<1x1x128xf32> to vector<1x128xf32>
    %cst = arith.constant dense<0.000000e+00> : vector<32xf32>
    %8 = vector.multi_reduction <add>, %3, %cst [1] : vector<32x128xf32> to vector<32xf32>
    %9 = vector.shape_cast %8 : vector<32xf32> to vector<32x1xf32>
    %cst_8 = arith.constant 1.280000e+02 : f32
    %10 = vector.broadcast %cst_8 : f32 to vector<32x1xf32>
    %11 = arith.divf %9, %10 : vector<32x1xf32>
    %12 = vector.broadcast %11 : vector<32x1xf32> to vector<32x128xf32>
    %13 = arith.subf %3, %12 : vector<32x128xf32>
    %14 = vector.broadcast %11 : vector<32x1xf32> to vector<32x128xf32>
    %15 = arith.subf %3, %14 : vector<32x128xf32>
    %16 = arith.mulf %13, %15 : vector<32x128xf32>
    %cst_9 = arith.constant dense<0.000000e+00> : vector<32xf32>
    %17 = vector.multi_reduction <add>, %16, %cst_9 [1] : vector<32x128xf32> to vector<32xf32>
    %18 = vector.shape_cast %17 : vector<32xf32> to vector<32x1xf32>
    %cst_10 = arith.constant 1.280000e+02 : f32
    %19 = vector.broadcast %cst_10 : f32 to vector<32x1xf32>
    %20 = arith.divf %18, %19 : vector<32x1xf32>
    %21 = vector.broadcast %11 : vector<32x1xf32> to vector<32x128xf32>
    %22 = arith.subf %3, %21 : vector<32x128xf32>
    %cst_11 = arith.constant 9.99999974E-6 : f32
    %23 = vector.broadcast %cst_11 : f32 to vector<32x1xf32>
    %24 = arith.addf %20, %23 : vector<32x1xf32>
    %25 = math.rsqrt %24 : vector<32x1xf32>
    %26 = vector.broadcast %25 : vector<32x1xf32> to vector<32x128xf32>
    %27 = arith.mulf %22, %26 : vector<32x128xf32>
    %28 = vector.broadcast %5 : vector<1x128xf32> to vector<32x128xf32>
    %29 = arith.mulf %27, %28 : vector<32x128xf32>
    %30 = vector.broadcast %7 : vector<1x128xf32> to vector<32x128xf32>
    %31 = arith.addf %29, %30 : vector<32x128xf32>
    %c0_12 = arith.constant 0 : index
    %c0_13 = arith.constant 0 : index
    %c0_14 = arith.constant 0 : index
    %32 = vector.load %arg5[%c0_12, %c0_13, %c0_14] : memref<1x128x384xf32, #tpu.memory_space<vmem>>, vector<1x128x384xf32>
    %33 = vector.shape_cast %32 : vector<1x128x384xf32> to vector<128x384xf32>
    %cst_15 = arith.constant dense<0.000000e+00> : vector<32x384xf32>
    %34 = tpu.matmul %31, %33, %cst_15 {dimension_numbers = #tpu.dot_dimension_numbers<[1], [0], [0], [1], [0, 0, 1, 1], [], []>} : vector<32x128xf32>, vector<128x384xf32>, vector<32x384xf32> -> vector<32x384xf32>
    %35 = vector.extract_strided_slice %34 {offsets = [0, 0], sizes = [32, 128], strides = [1, 1]} : vector<32x384xf32> to vector<32x128xf32>
    %36 = vector.extract_strided_slice %34 {offsets = [0, 128], sizes = [32, 128], strides = [1, 1]} : vector<32x384xf32> to vector<32x128xf32>
    %37 = vector.extract_strided_slice %34 {offsets = [0, 256], sizes = [32, 128], strides = [1, 1]} : vector<32x384xf32> to vector<32x128xf32>
    %38 = vector.extract_strided_slice %35 {offsets = [0, 0], sizes = [32, 32], strides = [1, 1]} : vector<32x128xf32> to vector<32x32xf32>
    %39 = vector.extract_strided_slice %35 {offsets = [0, 32], sizes = [32, 32], strides = [1, 1]} : vector<32x128xf32> to vector<32x32xf32>
    %40 = vector.extract_strided_slice %35 {offsets = [0, 64], sizes = [32, 32], strides = [1, 1]} : vector<32x128xf32> to vector<32x32xf32>
    %41 = vector.extract_strided_slice %35 {offsets = [0, 96], sizes = [32, 32], strides = [1, 1]} : vector<32x128xf32> to vector<32x32xf32>
    %42 = tpu.concatenate %38, %39, %40, %41 in 0 : vector<32x32xf32>, vector<32x32xf32>, vector<32x32xf32>, vector<32x32xf32> -> vector<128x32xf32>
    %43 = vector.extract_strided_slice %36 {offsets = [0, 0], sizes = [32, 32], strides = [1, 1]} : vector<32x128xf32> to vector<32x32xf32>
    %44 = vector.extract_strided_slice %36 {offsets = [0, 32], sizes = [32, 32], strides = [1, 1]} : vector<32x128xf32> to vector<32x32xf32>
    %45 = vector.extract_strided_slice %36 {offsets = [0, 64], sizes = [32, 32], strides = [1, 1]} : vector<32x128xf32> to vector<32x32xf32>
    %46 = vector.extract_strided_slice %36 {offsets = [0, 96], sizes = [32, 32], strides = [1, 1]} : vector<32x128xf32> to vector<32x32xf32>
    %47 = tpu.concatenate %43, %44, %45, %46 in 0 : vector<32x32xf32>, vector<32x32xf32>, vector<32x32xf32>, vector<32x32xf32> -> vector<128x32xf32>
    %48 = vector.extract_strided_slice %37 {offsets = [0, 0], sizes = [32, 32], strides = [1, 1]} : vector<32x128xf32> to vector<32x32xf32>
    %49 = vector.extract_strided_slice %37 {offsets = [0, 32], sizes = [32, 32], strides = [1, 1]} : vector<32x128xf32> to vector<32x32xf32>
    %50 = vector.extract_strided_slice %37 {offsets = [0, 64], sizes = [32, 32], strides = [1, 1]} : vector<32x128xf32> to vector<32x32xf32>
    %51 = vector.extract_strided_slice %37 {offsets = [0, 96], sizes = [32, 32], strides = [1, 1]} : vector<32x128xf32> to vector<32x32xf32>
    %52 = tpu.concatenate %48, %49, %50, %51 in 0 : vector<32x32xf32>, vector<32x32xf32>, vector<32x32xf32>, vector<32x32xf32> -> vector<128x32xf32>
    %cst_16 = arith.constant dense<0.000000e+00> : vector<128x128xf32>
    %53 = tpu.matmul %42, %47, %cst_16 {dimension_numbers = #tpu.dot_dimension_numbers<[1], [1], [0], [0], [0, 0, 1, 0], [], []>} : vector<128x32xf32>, vector<128x32xf32>, vector<128x128xf32> -> vector<128x128xf32>
    %cst_17 = arith.constant 0.176776692 : f32
    %54 = vector.broadcast %cst_17 : f32 to vector<128x128xf32>
    %55 = arith.mulf %53, %54 : vector<128x128xf32>
    %c0_18 = arith.constant 0 : index
    %c0_19 = arith.constant 0 : index
    %56 = vector.load %arg2[%c0_18, %c0_19] : memref<128x128xf32, #tpu.memory_space<vmem>>, vector<128x128xf32>
    %57 = arith.addf %55, %56 : vector<128x128xf32>
    %cst_20 = arith.constant dense<0xFF800000> : vector<128xf32>
    %58 = vector.multi_reduction <maximumf>, %57, %cst_20 [1] : vector<128x128xf32> to vector<128xf32>
    %59 = vector.shape_cast %58 : vector<128xf32> to vector<128x1xf32>
    %60 = vector.broadcast %59 : vector<128x1xf32> to vector<128x128xf32>
    %61 = arith.subf %57, %60 : vector<128x128xf32>
    %62 = math.exp %61 : vector<128x128xf32>
    %cst_21 = arith.constant dense<0.000000e+00> : vector<128xf32>
    %63 = vector.multi_reduction <add>, %62, %cst_21 [1] : vector<128x128xf32> to vector<128xf32>
    %64 = vector.shape_cast %63 : vector<128xf32> to vector<128x1xf32>
    %65 = tpu.reciprocal %64 {approx = true} : vector<128x1xf32> -> vector<128x1xf32>
    %66 = vector.broadcast %65 : vector<128x1xf32> to vector<128x128xf32>
    %67 = arith.mulf %62, %66 : vector<128x128xf32>
    %cst_22 = arith.constant dense<0.000000e+00> : vector<128x32xf32>
    %68 = tpu.matmul %67, %52, %cst_22 {dimension_numbers = #tpu.dot_dimension_numbers<[1], [0], [0], [1], [0, 0, 1, 1], [], []>} : vector<128x128xf32>, vector<128x32xf32>, vector<128x32xf32> -> vector<128x32xf32>
    %69 = vector.extract_strided_slice %68 {offsets = [0, 0], sizes = [32, 32], strides = [1, 1]} : vector<128x32xf32> to vector<32x32xf32>
    %70 = vector.extract_strided_slice %68 {offsets = [32, 0], sizes = [32, 32], strides = [1, 1]} : vector<128x32xf32> to vector<32x32xf32>
    %71 = vector.extract_strided_slice %68 {offsets = [64, 0], sizes = [32, 32], strides = [1, 1]} : vector<128x32xf32> to vector<32x32xf32>
    %72 = vector.extract_strided_slice %68 {offsets = [96, 0], sizes = [32, 32], strides = [1, 1]} : vector<128x32xf32> to vector<32x32xf32>
    %73 = tpu.concatenate %69, %70, %71, %72 in 1 : vector<32x32xf32>, vector<32x32xf32>, vector<32x32xf32>, vector<32x32xf32> -> vector<32x128xf32>
    %c0_23 = arith.constant 0 : index
    %c0_24 = arith.constant 0 : index
    %c0_25 = arith.constant 0 : index
    %74 = vector.load %arg6[%c0_23, %c0_24, %c0_25] : memref<1x128x128xf32, #tpu.memory_space<vmem>>, vector<1x128x128xf32>
    %75 = vector.shape_cast %74 : vector<1x128x128xf32> to vector<128x128xf32>
    %cst_26 = arith.constant dense<0.000000e+00> : vector<32x128xf32>
    %76 = tpu.matmul %73, %75, %cst_26 {dimension_numbers = #tpu.dot_dimension_numbers<[1], [0], [0], [1], [0, 0, 1, 1], [], []>} : vector<32x128xf32>, vector<128x128xf32>, vector<32x128xf32> -> vector<32x128xf32>
    %77 = arith.addf %3, %76 : vector<32x128xf32>
    %c0_27 = arith.constant 0 : index
    %c0_28 = arith.constant 0 : index
    %c0_29 = arith.constant 0 : index
    %78 = vector.load %arg7[%c0_27, %c0_28, %c0_29] : memref<1x1x128xf32, #tpu.memory_space<vmem>>, vector<1x1x128xf32>
    %79 = vector.shape_cast %78 : vector<1x1x128xf32> to vector<1x128xf32>
    %c0_30 = arith.constant 0 : index
    %c0_31 = arith.constant 0 : index
    %c0_32 = arith.constant 0 : index
    %80 = vector.load %arg8[%c0_30, %c0_31, %c0_32] : memref<1x1x128xf32, #tpu.memory_space<vmem>>, vector<1x1x128xf32>
    %81 = vector.shape_cast %80 : vector<1x1x128xf32> to vector<1x128xf32>
    %cst_33 = arith.constant dense<0.000000e+00> : vector<32xf32>
    %82 = vector.multi_reduction <add>, %77, %cst_33 [1] : vector<32x128xf32> to vector<32xf32>
    %83 = vector.shape_cast %82 : vector<32xf32> to vector<32x1xf32>
    %cst_34 = arith.constant 1.280000e+02 : f32
    %84 = vector.broadcast %cst_34 : f32 to vector<32x1xf32>
    %85 = arith.divf %83, %84 : vector<32x1xf32>
    %86 = vector.broadcast %85 : vector<32x1xf32> to vector<32x128xf32>
    %87 = arith.subf %77, %86 : vector<32x128xf32>
    %88 = vector.broadcast %85 : vector<32x1xf32> to vector<32x128xf32>
    %89 = arith.subf %77, %88 : vector<32x128xf32>
    %90 = arith.mulf %87, %89 : vector<32x128xf32>
    %cst_35 = arith.constant dense<0.000000e+00> : vector<32xf32>
    %91 = vector.multi_reduction <add>, %90, %cst_35 [1] : vector<32x128xf32> to vector<32xf32>
    %92 = vector.shape_cast %91 : vector<32xf32> to vector<32x1xf32>
    %cst_36 = arith.constant 1.280000e+02 : f32
    %93 = vector.broadcast %cst_36 : f32 to vector<32x1xf32>
    %94 = arith.divf %92, %93 : vector<32x1xf32>
    %95 = vector.broadcast %85 : vector<32x1xf32> to vector<32x128xf32>
    %96 = arith.subf %77, %95 : vector<32x128xf32>
    %cst_37 = arith.constant 9.99999974E-6 : f32
    %97 = vector.broadcast %cst_37 : f32 to vector<32x1xf32>
    %98 = arith.addf %94, %97 : vector<32x1xf32>
    %99 = math.rsqrt %98 : vector<32x1xf32>
    %100 = vector.broadcast %99 : vector<32x1xf32> to vector<32x128xf32>
    %101 = arith.mulf %96, %100 : vector<32x128xf32>
    %102 = vector.broadcast %79 : vector<1x128xf32> to vector<32x128xf32>
    %103 = arith.mulf %101, %102 : vector<32x128xf32>
    %104 = vector.broadcast %81 : vector<1x128xf32> to vector<32x128xf32>
    %105 = arith.addf %103, %104 : vector<32x128xf32>
    %c0_38 = arith.constant 0 : index
    %c0_39 = arith.constant 0 : index
    %c0_40 = arith.constant 0 : index
    %106 = vector.load %arg9[%c0_38, %c0_39, %c0_40] : memref<1x128x512xf32, #tpu.memory_space<vmem>>, vector<1x128x512xf32>
    %107 = vector.shape_cast %106 : vector<1x128x512xf32> to vector<128x512xf32>
    %cst_41 = arith.constant dense<0.000000e+00> : vector<32x512xf32>
    %108 = tpu.matmul %105, %107, %cst_41 {dimension_numbers = #tpu.dot_dimension_numbers<[1], [0], [0], [1], [0, 0, 1, 1], [], []>} : vector<32x128xf32>, vector<128x512xf32>, vector<32x512xf32> -> vector<32x512xf32>
    %c0_42 = arith.constant 0 : index
    %c0_43 = arith.constant 0 : index
    %c0_44 = arith.constant 0 : index
    %109 = vector.load %arg10[%c0_42, %c0_43, %c0_44] : memref<1x1x512xf32, #tpu.memory_space<vmem>>, vector<1x1x512xf32>
    %110 = vector.shape_cast %109 : vector<1x1x512xf32> to vector<1x512xf32>
    %111 = vector.broadcast %110 : vector<1x512xf32> to vector<32x512xf32>
    %112 = arith.addf %108, %111 : vector<32x512xf32>
    %113 = arith.mulf %112, %112 : vector<32x512xf32>
    %114 = arith.mulf %112, %113 : vector<32x512xf32>
    %cst_45 = arith.constant 4.471500e-02 : f32
    %115 = vector.broadcast %cst_45 : f32 to vector<32x512xf32>
    %116 = arith.mulf %115, %114 : vector<32x512xf32>
    %117 = arith.addf %112, %116 : vector<32x512xf32>
    %cst_46 = arith.constant 0.797884583 : f32
    %118 = vector.broadcast %cst_46 : f32 to vector<32x512xf32>
    %119 = arith.mulf %118, %117 : vector<32x512xf32>
    %120 = math.tanh %119 : vector<32x512xf32>
    %cst_47 = arith.constant 1.000000e+00 : f32
    %121 = vector.broadcast %cst_47 : f32 to vector<32x512xf32>
    %122 = arith.addf %121, %120 : vector<32x512xf32>
    %cst_48 = arith.constant 5.000000e-01 : f32
    %123 = vector.broadcast %cst_48 : f32 to vector<32x512xf32>
    %124 = arith.mulf %123, %122 : vector<32x512xf32>
    %125 = arith.mulf %112, %124 : vector<32x512xf32>
    %c0_49 = arith.constant 0 : index
    %c0_50 = arith.constant 0 : index
    %c0_51 = arith.constant 0 : index
    %126 = vector.load %arg11[%c0_49, %c0_50, %c0_51] : memref<1x512x128xf32, #tpu.memory_space<vmem>>, vector<1x512x128xf32>
    %127 = vector.shape_cast %126 : vector<1x512x128xf32> to vector<512x128xf32>
    %cst_52 = arith.constant dense<0.000000e+00> : vector<32x128xf32>
    %128 = tpu.matmul %125, %127, %cst_52 {dimension_numbers = #tpu.dot_dimension_numbers<[1], [0], [0], [1], [0, 0, 1, 1], [], []>} : vector<32x512xf32>, vector<512x128xf32>, vector<32x128xf32> -> vector<32x128xf32>
    %129 = arith.addf %77, %128 : vector<32x128xf32>
    %c0_53 = arith.constant 0 : index
    %c0_54 = arith.constant 0 : index
    %c0_55 = arith.constant 0 : index
    %130 = vector.load %arg12[%c0_53, %c0_54, %c0_55] : memref<1x1x128xf32, #tpu.memory_space<vmem>>, vector<1x1x128xf32>
    %131 = vector.shape_cast %130 : vector<1x1x128xf32> to vector<1x128xf32>
    %132 = vector.broadcast %131 : vector<1x128xf32> to vector<32x128xf32>
    %133 = arith.addf %129, %132 : vector<32x128xf32>
    %c0_56 = arith.constant 0 : index
    %c0_57 = arith.constant 0 : index
    %134 = vector.load %arg18[%c0_56, %c0_57] : memref<32x128xf32, #tpu.memory_space<vmem>>, vector<32x128xf32>
    tpu.vector_store %arg18[%c0_56, %c0_57], %133 {strides = array<i32>} : memref<32x128xf32, #tpu.memory_space<vmem>>, vector<32x128xf32>,
    %c1_i32 = arith.constant 1 : i32
    %135 = arith.cmpi eq, %arg0, %c1_i32 : i32
    %136 = arith.extui %135 : i1 to i32
    %c0_i32_58 = arith.constant 0 : i32
    %137 = arith.cmpi ne, %136, %c0_i32_58 : i32
    scf.if %137 {
      %c0_59 = arith.constant 0 : index
      %c0_60 = arith.constant 0 : index
      %138 = vector.load %arg13[%c0_59, %c0_60] : memref<1x128xf32, #tpu.memory_space<vmem>>, vector<1x128xf32>
      %c0_61 = arith.constant 0 : index
      %c0_62 = arith.constant 0 : index
      %139 = vector.load %arg14[%c0_61, %c0_62] : memref<1x128xf32, #tpu.memory_space<vmem>>, vector<1x128xf32>
      %cst_63 = arith.constant dense<0.000000e+00> : vector<32xf32>
      %140 = vector.multi_reduction <add>, %133, %cst_63 [1] : vector<32x128xf32> to vector<32xf32>
      %141 = vector.shape_cast %140 : vector<32xf32> to vector<32x1xf32>
      %cst_64 = arith.constant 1.280000e+02 : f32
      %142 = vector.broadcast %cst_64 : f32 to vector<32x1xf32>
      %143 = arith.divf %141, %142 : vector<32x1xf32>
      %144 = vector.broadcast %143 : vector<32x1xf32> to vector<32x128xf32>
      %145 = arith.subf %133, %144 : vector<32x128xf32>
      %146 = vector.broadcast %143 : vector<32x1xf32> to vector<32x128xf32>
      %147 = arith.subf %133, %146 : vector<32x128xf32>
      %148 = arith.mulf %145, %147 : vector<32x128xf32>
      %cst_65 = arith.constant dense<0.000000e+00> : vector<32xf32>
      %149 = vector.multi_reduction <add>, %148, %cst_65 [1] : vector<32x128xf32> to vector<32xf32>
      %150 = vector.shape_cast %149 : vector<32xf32> to vector<32x1xf32>
      %cst_66 = arith.constant 1.280000e+02 : f32
      %151 = vector.broadcast %cst_66 : f32 to vector<32x1xf32>
      %152 = arith.divf %150, %151 : vector<32x1xf32>
      %153 = vector.broadcast %143 : vector<32x1xf32> to vector<32x128xf32>
      %154 = arith.subf %133, %153 : vector<32x128xf32>
      %cst_67 = arith.constant 9.99999974E-6 : f32
      %155 = vector.broadcast %cst_67 : f32 to vector<32x1xf32>
      %156 = arith.addf %152, %155 : vector<32x1xf32>
      %157 = math.rsqrt %156 : vector<32x1xf32>
      %158 = vector.broadcast %157 : vector<32x1xf32> to vector<32x128xf32>
      %159 = arith.mulf %154, %158 : vector<32x128xf32>
      %160 = vector.broadcast %138 : vector<1x128xf32> to vector<32x128xf32>
      %161 = arith.mulf %159, %160 : vector<32x128xf32>
      %162 = vector.broadcast %139 : vector<1x128xf32> to vector<32x128xf32>
      %163 = arith.addf %161, %162 : vector<32x128xf32>
      %c0_68 = arith.constant 0 : index
      %c0_69 = arith.constant 0 : index
      %164 = vector.load %arg15[%c0_68, %c0_69] : memref<128x128xf32, #tpu.memory_space<vmem>>, vector<128x128xf32>
      %cst_70 = arith.constant dense<0.000000e+00> : vector<32x128xf32>
      %165 = tpu.matmul %163, %164, %cst_70 {dimension_numbers = #tpu.dot_dimension_numbers<[1], [0], [0], [1], [0, 0, 1, 1], [], []>} : vector<32x128xf32>, vector<128x128xf32>, vector<32x128xf32> -> vector<32x128xf32>
      %c0_71 = arith.constant 0 : index
      %c0_72 = arith.constant 0 : index
      %166 = vector.load %arg16[%c0_71, %c0_72] : memref<1x128xf32, #tpu.memory_space<vmem>>, vector<1x128xf32>
      %167 = vector.broadcast %166 : vector<1x128xf32> to vector<32x128xf32>
      %168 = arith.addf %165, %167 : vector<32x128xf32>
      %c0_73 = arith.constant 0 : index
      %c0_74 = arith.constant 0 : index
      %169 = vector.load %arg17[%c0_73, %c0_74] : memref<32x128xf32, #tpu.memory_space<vmem>>, vector<32x128xf32>
      tpu.vector_store %arg17[%c0_73, %c0_74], %168 {strides = array<i32>} : memref<32x128xf32, #tpu.memory_space<vmem>>, vector<32x128xf32>,
    } else {
    }
    return
  }
  func.func @transform_0(%arg0: i32) -> (i32, i32) {
    %c0_i32 = arith.constant 0 : i32
    %c0_i32_0 = arith.constant 0 : i32
    %c0_i32_1 = arith.constant 0 : i32
    return %c0_i32, %c0_i32_0 : i32, i32
  }
  func.func @transform_1(%arg0: i32) -> (i32, i32) {
    %c0_i32 = arith.constant 0 : i32
    %c0_i32_0 = arith.constant 0 : i32
    %c0_i32_1 = arith.constant 0 : i32
    return %c0_i32, %c0_i32_0 : i32, i32
  }
  func.func @transform_2(%arg0: i32) -> (i32, i32, i32) {
    %c0_i32 = arith.constant 0 : i32
    %c0_i32_0 = arith.constant 0 : i32
    %c0_i32_1 = arith.constant 0 : i32
    return %arg0, %c0_i32, %c0_i32_0 : i32, i32, i32
  }
  func.func @transform_3(%arg0: i32) -> (i32, i32, i32) {
    %c0_i32 = arith.constant 0 : i32
    %c0_i32_0 = arith.constant 0 : i32
    %c0_i32_1 = arith.constant 0 : i32
    return %arg0, %c0_i32, %c0_i32_0 : i32, i32, i32
  }
  func.func @transform_4(%arg0: i32) -> (i32, i32, i32) {
    %c0_i32 = arith.constant 0 : i32
    %c0_i32_0 = arith.constant 0 : i32
    %c0_i32_1 = arith.constant 0 : i32
    return %arg0, %c0_i32, %c0_i32_0 : i32, i32, i32
  }
  func.func @transform_5(%arg0: i32) -> (i32, i32, i32) {
    %c0_i32 = arith.constant 0 : i32
    %c0_i32_0 = arith.constant 0 : i32
    %c0_i32_1 = arith.constant 0 : i32
    return %arg0, %c0_i32, %c0_i32_0 : i32, i32, i32
  }
  func.func @transform_6(%arg0: i32) -> (i32, i32, i32) {
    %c0_i32 = arith.constant 0 : i32
    %c0_i32_0 = arith.constant 0 : i32
    %c0_i32_1 = arith.constant 0 : i32
    return %arg0, %c0_i32, %c0_i32_0 : i32, i32, i32
  }
  func.func @transform_7(%arg0: i32) -> (i32, i32, i32) {
    %c0_i32 = arith.constant 0 : i32
    %c0_i32_0 = arith.constant 0 : i32
    %c0_i32_1 = arith.constant 0 : i32
    return %arg0, %c0_i32, %c0_i32_0 : i32, i32, i32
  }
  func.func @transform_8(%arg0: i32) -> (i32, i32, i32) {
    %c0_i32 = arith.constant 0 : i32
    %c0_i32_0 = arith.constant 0 : i32
    %c0_i32_1 = arith.constant 0 : i32
    return %arg0, %c0_i32, %c0_i32_0 : i32, i32, i32
  }
  func.func @transform_9(%arg0: i32) -> (i32, i32, i32) {
    %c0_i32 = arith.constant 0 : i32
    %c0_i32_0 = arith.constant 0 : i32
    %c0_i32_1 = arith.constant 0 : i32
    return %arg0, %c0_i32, %c0_i32_0 : i32, i32, i32
  }
  func.func @transform_10(%arg0: i32) -> (i32, i32, i32) {
    %c0_i32 = arith.constant 0 : i32
    %c0_i32_0 = arith.constant 0 : i32
    %c0_i32_1 = arith.constant 0 : i32
    return %arg0, %c0_i32, %c0_i32_0 : i32, i32, i32
  }
  func.func @transform_11(%arg0: i32) -> (i32, i32, i32) {
    %c0_i32 = arith.constant 0 : i32
    %c0_i32_0 = arith.constant 0 : i32
    %c0_i32_1 = arith.constant 0 : i32
    return %arg0, %c0_i32, %c0_i32_0 : i32, i32, i32
  }
  func.func @transform_12(%arg0: i32) -> (i32, i32) {
    %c0_i32 = arith.constant 0 : i32
    %c0_i32_0 = arith.constant 0 : i32
    %c0_i32_1 = arith.constant 0 : i32
    return %c0_i32, %c0_i32_0 : i32, i32
  }
  func.func @transform_13(%arg0: i32) -> (i32, i32) {
    %c0_i32 = arith.constant 0 : i32
    %c0_i32_0 = arith.constant 0 : i32
    %c0_i32_1 = arith.constant 0 : i32
    return %c0_i32, %c0_i32_0 : i32, i32
  }
  func.func @transform_14(%arg0: i32) -> (i32, i32) {
    %c0_i32 = arith.constant 0 : i32
    %c0_i32_0 = arith.constant 0 : i32
    %c0_i32_1 = arith.constant 0 : i32
    return %c0_i32, %c0_i32_0 : i32, i32
  }
  func.func @transform_15(%arg0: i32) -> (i32, i32) {
    %c0_i32 = arith.constant 0 : i32
    %c0_i32_0 = arith.constant 0 : i32
    %c0_i32_1 = arith.constant 0 : i32
    return %c0_i32, %c0_i32_0 : i32, i32
  }
  func.func @transform_16(%arg0: i32) -> (i32, i32) {
    %c0_i32 = arith.constant 0 : i32
    %c0_i32_0 = arith.constant 0 : i32
    %c0_i32_1 = arith.constant 0 : i32
    return %c0_i32, %c0_i32_0 : i32, i32
  }
}

</mosaic_0001>

<llo_original>
// kernel: transformer_forward.1
$region0: #{transformer_forward.1}
  #allocation0 [shape = 'u32[]', space=smem, size = 0x4, offset = 0x4, fixed_abs, tag = 'smem constant byte address 0x4 - core index']
  #allocation1 [shape = 'u32[72,128]{1,0:T(1,128)}', space=vmem, size = 0x9000, scoped, tag = 'internal scratch']
  #allocation2 [shape = 'f32[32,128]{1,0:T(8,128)}', space=vmem, size = 0x4000, scoped, tag = 'scratch operand']
  %s0 = inlined_call_operand.vmem [shape: f32[32,128], index: 0, kind: input, shape index: {}]
  %s1 = inlined_call_operand.vmem [shape: f32[128,128], index: 1, kind: input, shape index: {}]
  %s2 = inlined_call_operand.vmem [shape: f32[2,1,128], index: 2, kind: input, shape index: {}]
  %s3 = inlined_call_operand.vmem [shape: f32[2,1,128], index: 3, kind: input, shape index: {}]
  %s4 = inlined_call_operand.hbm [shape: f32[2,128,384], index: 4, kind: input, shape index: {}]
  %s5 = inlined_call_operand.vmem [shape: f32[2,128,128], index: 5, kind: input, shape index: {}]
  %s6 = inlined_call_operand.vmem [shape: f32[2,1,128], index: 6, kind: input, shape index: {}]
  %s7 = inlined_call_operand.vmem [shape: f32[2,1,128], index: 7, kind: input, shape index: {}]
  %s8 = inlined_call_operand.hbm [shape: f32[2,128,512], index: 8, kind: input, shape index: {}]
  %s9 = inlined_call_operand.vmem [shape: f32[2,1,512], index: 9, kind: input, shape index: {}]
  %s10 = inlined_call_operand.hbm [shape: f32[2,512,128], index: 10, kind: input, shape index: {}]
  %s11 = inlined_call_operand.vmem [shape: f32[2,1,128], index: 11, kind: input, shape index: {}]
  %s12 = inlined_call_operand.vmem [shape: f32[1,128], index: 12, kind: input, shape index: {}]
  %s13 = inlined_call_operand.vmem [shape: f32[1,128], index: 13, kind: input, shape index: {}]
  %s14 = inlined_call_operand.hbm [shape: f32[128,128], index: 14, kind: input, shape index: {}]
  %s15 = inlined_call_operand.vmem [shape: f32[1,128], index: 15, kind: input, shape index: {}]
  %s16 = inlined_call_operand.hbm [shape: f32[32,128], index: 16, kind: output, shape index: {}]
  %s17 = sld [smem:[#allocation0]]
  $region121: #{transformer_forward.1} parent=0
    _
  %s19 = ssub.s32 1, %s17
  %s20 = scalar_select 0, %s19, %s17
  $region1: #{transformer_forward.1} parent=0
    #allocation3 [shape = 'u8[393216]{0}', space=vmem, size = 0x60000, scoped, tag = 'input window, operand 4']
    #allocation4 [shape = 's32[2]{0}', space=sflag, size = 0x8, scoped, tag = 'scoped memory for transformer_forward.1']
    #allocation5 [shape = 's32[2]{0}', space=sflag, size = 0x8, scoped, tag = 'scoped memory for transformer_forward.1']
    #allocation6 [shape = 'u8[524288]{0}', space=vmem, size = 0x80000, scoped, tag = 'input window, operand 8']
    #allocation7 [shape = 's32[2]{0}', space=sflag, size = 0x8, scoped, tag = 'scoped memory for transformer_forward.1']
    #allocation8 [shape = 'u8[524288]{0}', space=vmem, size = 0x80000, scoped, tag = 'input window, operand 10']
    #allocation9 [shape = 'u8[65536]{0}', space=vmem, size = 0x10000, scoped, tag = 'input window, operand 14, single buffered']
    #allocation10 [shape = 's32[1]{0}', space=sflag, size = 0x4, scoped, tag = 'scoped memory for transformer_forward.1']
    #allocation11 [shape = 'u8[16384]{0}', space=vmem, size = 0x4000, scoped, tag = 'output window, operand 0, single buffered']
    %21 = vsyncpa [#allocation4], 0
    %s22 = scalar_lea.sflag [#allocation4], 1
    %23 = vsyncpa %s22, 0
    %24 = vsyncpa [#allocation7], 0
    %s25 = scalar_lea.sflag [#allocation7], 1
    %26 = vsyncpa %s25, 0
    %27 = vsyncpa [#allocation10], 0
    %28 = vsyncpa [#allocation5], 0
    loop: start=0, step=1, limit=4
    $region2: #{transformer_forward.1} parent=1 // loop_pre_header
      _
    $region3: #{transformer_forward.1} parent=1 // loop_header
      %s30 = sphi 0, %s34
      %p31 = scmp.ge.s32.totalorder %s30, 4
      %s38 = sphi 0, %s38
      %s40 = sphi 0, %s38
      %s41 = sphi 0, %s40
      %s55 = sphi 0, %s41
      %s59 = sphi 0, %s59
      %s61 = sphi 0, %s59
      %s62 = sphi 0, %s61
      %s76 = sphi 0, %s62
      %s82 = sphi 0, %s84
      %s85 = sphi 0, %s82
      %s86 = sphi 0, %s85
      %s102 = sphi 0, %s86
      %s108 = sphi 0, %s110
      %s111 = sphi 0, %s108
      %s112 = sphi 0, %s111
      %s128 = sphi 0, %s112
      %s134 = sphi 0, %s136
      %s137 = sphi 0, %s134
      %s138 = sphi 0, %s137
      %s154 = sphi 0, %s138
      %s160 = sphi 0, %s162
      %s163 = sphi 0, %s160
      %s164 = sphi 0, %s163
      %s180 = sphi 0, %s164
      %s186 = sphi 0, %s188
      %s189 = sphi 0, %s186
      %s190 = sphi 0, %s189
      %s206 = sphi 0, %s190
      %s212 = sphi 0, %s214
      %s215 = sphi 0, %s212
      %s216 = sphi 0, %s215
      %s232 = sphi 0, %s216
      %s238 = sphi 0, %s240
      %s241 = sphi 0, %s238
      %s242 = sphi 0, %s241
      %s258 = sphi 0, %s242
      %s264 = sphi 0, %s266
      %s267 = sphi 0, %s264
      %s268 = sphi 0, %s267
      %s284 = sphi 0, %s268
      %s290 = sphi 0, %s292
      %s293 = sphi 0, %s290
      %s294 = sphi 0, %s293
      %s310 = sphi 0, %s294
      %s316 = sphi 0, %s318
      %s319 = sphi 0, %s316
      %s320 = sphi 0, %s319
      %s336 = sphi 0, %s320
      %s340 = sphi 0, %s340
      %s342 = sphi 0, %s340
      %s343 = sphi 0, %s342
      %s357 = sphi 0, %s343
      %s361 = sphi 0, %s361
      %s363 = sphi 0, %s361
      %s364 = sphi 0, %s363
      %s378 = sphi 0, %s364
      %s382 = sphi 0, %s382
      %s384 = sphi 0, %s382
      %s385 = sphi 0, %s384
      %s399 = sphi 0, %s385
      %s403 = sphi 0, %s403
      %s405 = sphi 0, %s403
      %s406 = sphi 0, %s405
      %s420 = sphi 0, %s406
      %s424 = sphi 0, %s424
      %s426 = sphi 0, %s424
      %s427 = sphi 0, %s426
      %s441 = sphi 0, %s427
    $region4: #{transformer_forward.1} parent=1 // loop_header_branch
      %33 = sbr.rel (%p31) target = $region8
    $region5: #{transformer_forward.1} parent=1 // loop_body
      %s35 = ssub.s32 %s30, 1
      %s36 = ssub.s32 %s30, 2
      %s37 = sadd.s32 %s30, 1
      %s39 = sadd.s32 %s38, 1
      %p42 = scmp.eq.s32.totalorder %s30, 1
      %p43 = scmp.ne.s32.totalorder %s38, %s40
      %p44 = scmp.eq.s32.totalorder %s30, 0
      %p45 = por %p43, %p44
      %p46 = scmp.ne.s32.totalorder %s38, %s40
      %p47 = scmp.eq.s32.totalorder %s35, 1
      %p48 = por %p46, %p47
      %p49 = scmp.ne.s32.totalorder %s40, %s41
      %p50 = scmp.eq.s32.totalorder %s35, 0
      %p51 = por %p49, %p50
      %p52 = scmp.ne.s32.totalorder %s40, %s41
      %p53 = scmp.eq.s32.totalorder %s36, 1
      %p54 = por %p52, %p53
      %p56 = scmp.ne.s32.totalorder %s41, %s55
      %p57 = scmp.eq.s32.totalorder %s36, 0
      %p58 = por %p56, %p57
      %s60 = sadd.s32 %s59, 1
      %p63 = scmp.eq.s32.totalorder %s30, 1
      %p64 = scmp.ne.s32.totalorder %s59, %s61
      %p65 = scmp.eq.s32.totalorder %s30, 0
      %p66 = por %p64, %p65
      %p67 = scmp.ne.s32.totalorder %s59, %s61
      %p68 = scmp.eq.s32.totalorder %s35, 1
      %p69 = por %p67, %p68
      %p70 = scmp.ne.s32.totalorder %s61, %s62
      %p71 = scmp.eq.s32.totalorder %s35, 0
      %p72 = por %p70, %p71
      %p73 = scmp.ne.s32.totalorder %s61, %s62
      %p74 = scmp.eq.s32.totalorder %s36, 1
      %p75 = por %p73, %p74
      %p77 = scmp.ne.s32.totalorder %s62, %s76
      %p78 = scmp.eq.s32.totalorder %s36, 0
      %p79 = por %p77, %p78
      %s80 = ssub.s32 %s30, %s37
      %p81 = scmp.eq.s32.totalorder %s80, 0
      %s83 = sadd.s32 %s82, 1
      %s84 = scalar_select %p81, %s82, %s83
      %p87 = pneg %p81
      %p88 = scmp.eq.s32.totalorder %s30, 1
      %p89 = por %p87, %p88
      %p90 = scmp.ne.s32.totalorder %s82, %s85
      %p91 = scmp.eq.s32.totalorder %s30, 0
      %p92 = por %p90, %p91
      %p93 = scmp.ne.s32.totalorder %s82, %s85
      %p94 = scmp.eq.s32.totalorder %s35, 1
      %p95 = por %p93, %p94
      %p96 = scmp.ne.s32.totalorder %s85, %s86
      %p97 = scmp.eq.s32.totalorder %s35, 0
      %p98 = por %p96, %p97
      %p99 = scmp.ne.s32.totalorder %s85, %s86
      %p100 = scmp.eq.s32.totalorder %s36, 1
      %p101 = por %p99, %p100
      %p103 = scmp.ne.s32.totalorder %s86, %s102
      %p104 = scmp.eq.s32.totalorder %s36, 0
      %p105 = por %p103, %p104
      %s106 = ssub.s32 %s30, %s37
      %p107 = scmp.eq.s32.totalorder %s106, 0
      %s109 = sadd.s32 %s108, 1
      %s110 = scalar_select %p107, %s108, %s109
      %p113 = pneg %p107
      %p114 = scmp.eq.s32.totalorder %s30, 1
      %p115 = por %p113, %p114
      %p116 = scmp.ne.s32.totalorder %s108, %s111
      %p117 = scmp.eq.s32.totalorder %s30, 0
      %p118 = por %p116, %p117
      %p119 = scmp.ne.s32.totalorder %s108, %s111
      %p120 = scmp.eq.s32.totalorder %s35, 1
      %p121 = por %p119, %p120
      %p122 = scmp.ne.s32.totalorder %s111, %s112
      %p123 = scmp.eq.s32.totalorder %s35, 0
      %p124 = por %p122, %p123
      %p125 = scmp.ne.s32.totalorder %s111, %s112
      %p126 = scmp.eq.s32.totalorder %s36, 1
      %p127 = por %p125, %p126
      %p129 = scmp.ne.s32.totalorder %s112, %s128
      %p130 = scmp.eq.s32.totalorder %s36, 0
      %p131 = por %p129, %p130
      %s132 = ssub.s32 %s30, %s37
      %p133 = scmp.eq.s32.totalorder %s132, 0
      %s135 = sadd.s32 %s134, 1
      %s136 = scalar_select %p133, %s134, %s135
      %p139 = pneg %p133
      %p140 = scmp.eq.s32.totalorder %s30, 1
      %p141 = por %p139, %p140
      %p142 = scmp.ne.s32.totalorder %s134, %s137
      %p143 = scmp.eq.s32.totalorder %s30, 0
      %p144 = por %p142, %p143
      %p145 = scmp.ne.s32.totalorder %s134, %s137
      %p146 = scmp.eq.s32.totalorder %s35, 1
      %p147 = por %p145, %p146
      %p148 = scmp.ne.s32.totalorder %s137, %s138
      %p149 = scmp.eq.s32.totalorder %s35, 0
      %p150 = por %p148, %p149
      %p151 = scmp.ne.s32.totalorder %s137, %s138
      %p152 = scmp.eq.s32.totalorder %s36, 1
      %p153 = por %p151, %p152
      %p155 = scmp.ne.s32.totalorder %s138, %s154
      %p156 = scmp.eq.s32.totalorder %s36, 0
      %p157 = por %p155, %p156
      %s158 = ssub.s32 %s30, %s37
      %p159 = scmp.eq.s32.totalorder %s158, 0
      %s161 = sadd.s32 %s160, 1
      %s162 = scalar_select %p159, %s160, %s161
      %p165 = pneg %p159
      %p166 = scmp.eq.s32.totalorder %s30, 1
      %p167 = por %p165, %p166
      %p168 = scmp.ne.s32.totalorder %s160, %s163
      %p169 = scmp.eq.s32.totalorder %s30, 0
      %p170 = por %p168, %p169
      %p171 = scmp.ne.s32.totalorder %s160, %s163
      %p172 = scmp.eq.s32.totalorder %s35, 1
      %p173 = por %p171, %p172
      %p174 = scmp.ne.s32.totalorder %s163, %s164
      %p175 = scmp.eq.s32.totalorder %s35, 0
      %p176 = por %p174, %p175
      %p177 = scmp.ne.s32.totalorder %s163, %s164
      %p178 = scmp.eq.s32.totalorder %s36, 1
      %p179 = por %p177, %p178
      %p181 = scmp.ne.s32.totalorder %s164, %s180
      %p182 = scmp.eq.s32.totalorder %s36, 0
      %p183 = por %p181, %p182
      %s184 = ssub.s32 %s30, %s37
      %p185 = scmp.eq.s32.totalorder %s184, 0
      %s187 = sadd.s32 %s186, 1
      %s188 = scalar_select %p185, %s186, %s187
      %p191 = pneg %p185
      %p192 = scmp.eq.s32.totalorder %s30, 1
      %p193 = por %p191, %p192
      %p194 = scmp.ne.s32.totalorder %s186, %s189
      %p195 = scmp.eq.s32.totalorder %s30, 0
      %p196 = por %p194, %p195
      %p197 = scmp.ne.s32.totalorder %s186, %s189
      %p198 = scmp.eq.s32.totalorder %s35, 1
      %p199 = por %p197, %p198
      %p200 = scmp.ne.s32.totalorder %s189, %s190
      %p201 = scmp.eq.s32.totalorder %s35, 0
      %p202 = por %p200, %p201
      %p203 = scmp.ne.s32.totalorder %s189, %s190
      %p204 = scmp.eq.s32.totalorder %s36, 1
      %p205 = por %p203, %p204
      %p207 = scmp.ne.s32.totalorder %s190, %s206
      %p208 = scmp.eq.s32.totalorder %s36, 0
      %p209 = por %p207, %p208
      %s210 = ssub.s32 %s30, %s37
      %p211 = scmp.eq.s32.totalorder %s210, 0
      %s213 = sadd.s32 %s212, 1
      %s214 = scalar_select %p211, %s212, %s213
      %p217 = pneg %p211
      %p218 = scmp.eq.s32.totalorder %s30, 1
      %p219 = por %p217, %p218
      %p220 = scmp.ne.s32.totalorder %s212, %s215
      %p221 = scmp.eq.s32.totalorder %s30, 0
      %p222 = por %p220, %p221
      %p223 = scmp.ne.s32.totalorder %s212, %s215
      %p224 = scmp.eq.s32.totalorder %s35, 1
      %p225 = por %p223, %p224
      %p226 = scmp.ne.s32.totalorder %s215, %s216
      %p227 = scmp.eq.s32.totalorder %s35, 0
      %p228 = por %p226, %p227
      %p229 = scmp.ne.s32.totalorder %s215, %s216
      %p230 = scmp.eq.s32.totalorder %s36, 1
      %p231 = por %p229, %p230
      %p233 = scmp.ne.s32.totalorder %s216, %s232
      %p234 = scmp.eq.s32.totalorder %s36, 0
      %p235 = por %p233, %p234
      %s236 = ssub.s32 %s30, %s37
      %p237 = scmp.eq.s32.totalorder %s236, 0
      %s239 = sadd.s32 %s238, 1
      %s240 = scalar_select %p237, %s238, %s239
      %p243 = pneg %p237
      %p244 = scmp.eq.s32.totalorder %s30, 1
      %p245 = por %p243, %p244
      %p246 = scmp.ne.s32.totalorder %s238, %s241
      %p247 = scmp.eq.s32.totalorder %s30, 0
      %p248 = por %p246, %p247
      %p249 = scmp.ne.s32.totalorder %s238, %s241
      %p250 = scmp.eq.s32.totalorder %s35, 1
      %p251 = por %p249, %p250
      %p252 = scmp.ne.s32.totalorder %s241, %s242
      %p253 = scmp.eq.s32.totalorder %s35, 0
      %p254 = por %p252, %p253
      %p255 = scmp.ne.s32.totalorder %s241, %s242
      %p256 = scmp.eq.s32.totalorder %s36, 1
      %p257 = por %p255, %p256
      %p259 = scmp.ne.s32.totalorder %s242, %s258
      %p260 = scmp.eq.s32.totalorder %s36, 0
      %p261 = por %p259, %p260
      %s262 = ssub.s32 %s30, %s37
      %p263 = scmp.eq.s32.totalorder %s262, 0
      %s265 = sadd.s32 %s264, 1
      %s266 = scalar_select %p263, %s264, %s265
      %p269 = pneg %p263
      %p270 = scmp.eq.s32.totalorder %s30, 1
      %p271 = por %p269, %p270
      %p272 = scmp.ne.s32.totalorder %s264, %s267
      %p273 = scmp.eq.s32.totalorder %s30, 0
      %p274 = por %p272, %p273
      %p275 = scmp.ne.s32.totalorder %s264, %s267
      %p276 = scmp.eq.s32.totalorder %s35, 1
      %p277 = por %p275, %p276
      %p278 = scmp.ne.s32.totalorder %s267, %s268
      %p279 = scmp.eq.s32.totalorder %s35, 0
      %p280 = por %p278, %p279
      %p281 = scmp.ne.s32.totalorder %s267, %s268
      %p282 = scmp.eq.s32.totalorder %s36, 1
      %p283 = por %p281, %p282
      %p285 = scmp.ne.s32.totalorder %s268, %s284
      %p286 = scmp.eq.s32.totalorder %s36, 0
      %p287 = por %p285, %p286
      %s288 = ssub.s32 %s30, %s37
      %p289 = scmp.eq.s32.totalorder %s288, 0
      %s291 = sadd.s32 %s290, 1
      %s292 = scalar_select %p289, %s290, %s291
      %p295 = pneg %p289
      %p296 = scmp.eq.s32.totalorder %s30, 1
      %p297 = por %p295, %p296
      %p298 = scmp.ne.s32.totalorder %s290, %s293
      %p299 = scmp.eq.s32.totalorder %s30, 0
      %p300 = por %p298, %p299
      %p301 = scmp.ne.s32.totalorder %s290, %s293
      %p302 = scmp.eq.s32.totalorder %s35, 1
      %p303 = por %p301, %p302
      %p304 = scmp.ne.s32.totalorder %s293, %s294
      %p305 = scmp.eq.s32.totalorder %s35, 0
      %p306 = por %p304, %p305
      %p307 = scmp.ne.s32.totalorder %s293, %s294
      %p308 = scmp.eq.s32.totalorder %s36, 1
      %p309 = por %p307, %p308
      %p311 = scmp.ne.s32.totalorder %s294, %s310
      %p312 = scmp.eq.s32.totalorder %s36, 0
      %p313 = por %p311, %p312
      %s314 = ssub.s32 %s30, %s37
      %p315 = scmp.eq.s32.totalorder %s314, 0
      %s317 = sadd.s32 %s316, 1
      %s318 = scalar_select %p315, %s316, %s317
      %p321 = pneg %p315
      %p322 = scmp.eq.s32.totalorder %s30, 1
      %p323 = por %p321, %p322
      %p324 = scmp.ne.s32.totalorder %s316, %s319
      %p325 = scmp.eq.s32.totalorder %s30, 0
      %p326 = por %p324, %p325
      %p327 = scmp.ne.s32.totalorder %s316, %s319
      %p328 = scmp.eq.s32.totalorder %s35, 1
      %p329 = por %p327, %p328
      %p330 = scmp.ne.s32.totalorder %s319, %s320
      %p331 = scmp.eq.s32.totalorder %s35, 0
      %p332 = por %p330, %p331
      %p333 = scmp.ne.s32.totalorder %s319, %s320
      %p334 = scmp.eq.s32.totalorder %s36, 1
      %p335 = por %p333, %p334
      %p337 = scmp.ne.s32.totalorder %s320, %s336
      %p338 = scmp.eq.s32.totalorder %s36, 0
      %p339 = por %p337, %p338
      %s341 = sadd.s32 %s340, 1
      %p344 = scmp.eq.s32.totalorder %s30, 1
      %p345 = scmp.ne.s32.totalorder %s340, %s342
      %p346 = scmp.eq.s32.totalorder %s30, 0
      %p347 = por %p345, %p346
      %p348 = scmp.ne.s32.totalorder %s340, %s342
      %p349 = scmp.eq.s32.totalorder %s35, 1
      %p350 = por %p348, %p349
      %p351 = scmp.ne.s32.totalorder %s342, %s343
      %p352 = scmp.eq.s32.totalorder %s35, 0
      %p353 = por %p351, %p352
      %p354 = scmp.ne.s32.totalorder %s342, %s343
      %p355 = scmp.eq.s32.totalorder %s36, 1
      %p356 = por %p354, %p355
      %p358 = scmp.ne.s32.totalorder %s343, %s357
      %p359 = scmp.eq.s32.totalorder %s36, 0
      %p360 = por %p358, %p359
      %s362 = sadd.s32 %s361, 1
      %p365 = scmp.eq.s32.totalorder %s30, 1
      %p366 = scmp.ne.s32.totalorder %s361, %s363
      %p367 = scmp.eq.s32.totalorder %s30, 0
      %p368 = por %p366, %p367
      %p369 = scmp.ne.s32.totalorder %s361, %s363
      %p370 = scmp.eq.s32.totalorder %s35, 1
      %p371 = por %p369, %p370
      %p372 = scmp.ne.s32.totalorder %s363, %s364
      %p373 = scmp.eq.s32.totalorder %s35, 0
      %p374 = por %p372, %p373
      %p375 = scmp.ne.s32.totalorder %s363, %s364
      %p376 = scmp.eq.s32.totalorder %s36, 1
      %p377 = por %p375, %p376
      %p379 = scmp.ne.s32.totalorder %s364, %s378
      %p380 = scmp.eq.s32.totalorder %s36, 0
      %p381 = por %p379, %p380
      %s383 = sadd.s32 %s382, 1
      %p386 = scmp.eq.s32.totalorder %s30, 1
      %p387 = scmp.ne.s32.totalorder %s382, %s384
      %p388 = scmp.eq.s32.totalorder %s30, 0
      %p389 = por %p387, %p388
      %p390 = scmp.ne.s32.totalorder %s382, %s384
      %p391 = scmp.eq.s32.totalorder %s35, 1
      %p392 = por %p390, %p391
      %p393 = scmp.ne.s32.totalorder %s384, %s385
      %p394 = scmp.eq.s32.totalorder %s35, 0
      %p395 = por %p393, %p394
      %p396 = scmp.ne.s32.totalorder %s384, %s385
      %p397 = scmp.eq.s32.totalorder %s36, 1
      %p398 = por %p396, %p397
      %p400 = scmp.ne.s32.totalorder %s385, %s399
      %p401 = scmp.eq.s32.totalorder %s36, 0
      %p402 = por %p400, %p401
      %s404 = sadd.s32 %s403, 1
      %p407 = scmp.eq.s32.totalorder %s30, 1
      %p408 = scmp.ne.s32.totalorder %s403, %s405
      %p409 = scmp.eq.s32.totalorder %s30, 0
      %p410 = por %p408, %p409
      %p411 = scmp.ne.s32.totalorder %s403, %s405
      %p412 = scmp.eq.s32.totalorder %s35, 1
      %p413 = por %p411, %p412
      %p414 = scmp.ne.s32.totalorder %s405, %s406
      %p415 = scmp.eq.s32.totalorder %s35, 0
      %p416 = por %p414, %p415
      %p417 = scmp.ne.s32.totalorder %s405, %s406
      %p418 = scmp.eq.s32.totalorder %s36, 1
      %p419 = por %p417, %p418
      %p421 = scmp.ne.s32.totalorder %s406, %s420
      %p422 = scmp.eq.s32.totalorder %s36, 0
      %p423 = por %p421, %p422
      %s425 = sadd.s32 %s424, 1
      %p428 = scmp.eq.s32.totalorder %s30, 1
      %p429 = scmp.ne.s32.totalorder %s424, %s426
      %p430 = scmp.eq.s32.totalorder %s30, 0
      %p431 = por %p429, %p430
      %p432 = scmp.ne.s32.totalorder %s424, %s426
      %p433 = scmp.eq.s32.totalorder %s35, 1
      %p434 = por %p432, %p433
      %p435 = scmp.ne.s32.totalorder %s426, %s427
      %p436 = scmp.eq.s32.totalorder %s35, 0
      %p437 = por %p435, %p436
      %p438 = scmp.ne.s32.totalorder %s426, %s427
      %p439 = scmp.eq.s32.totalorder %s36, 1
      %p440 = por %p438, %p439
      %p442 = scmp.ne.s32.totalorder %s427, %s441
      %p443 = scmp.eq.s32.totalorder %s36, 0
      %p444 = por %p442, %p443
      %p445 = scmp.le.s32.totalorder 1, %s30
      %p446 = scmp.lt.s32.totalorder %s30, 3
      %p447 = pnand %p445, %p446
      %p448 = pneg %p447
      // Predicated region
      $region9: #{transformer_forward.1} parent=5 // pred_check
        _
      $region10: #{transformer_forward.1} parent=5 // pred_check_branch
        %450 = sbr.rel (%p447) target = $region12
      $region11: #{transformer_forward.1} parent=5 // pred_region
        %s451 = ssub.s32 %s30, 1
        // Predicated region
        $region13: #{transformer_forward.1} parent=11 // pred_check
          %p452 = pneg %p51
        $region14: #{transformer_forward.1} parent=11 // pred_check_branch
          %454 = sbr.rel (%p452) target = $region16
        $region15: #{transformer_forward.1} parent=11 // pred_region
          _
        $region16: #{transformer_forward.1} parent=11 // pred_fallthru
          _
        // Predicated region
        $region17: #{transformer_forward.1} parent=11 // pred_check
          %p455 = pneg %p72
        $region18: #{transformer_forward.1} parent=11 // pred_check_branch
          %457 = sbr.rel (%p455) target = $region20
        $region19: #{transformer_forward.1} parent=11 // pred_region
          _
        $region20: #{transformer_forward.1} parent=11 // pred_fallthru
          _
        // Predicated region
        $region21: #{transformer_forward.1} parent=11 // pred_check
          %p458 = pneg %p353
        $region22: #{transformer_forward.1} parent=11 // pred_check_branch
          %460 = sbr.rel (%p458) target = $region24
        $region23: #{transformer_forward.1} parent=11 // pred_region
          _
        $region24: #{transformer_forward.1} parent=11 // pred_fallthru
          _
        // Predicated region
        $region25: #{transformer_forward.1} parent=11 // pred_check
          %p461 = pneg %p374
        $region26: #{transformer_forward.1} parent=11 // pred_check_branch
          %463 = sbr.rel (%p461) target = $region28
        $region27: #{transformer_forward.1} parent=11 // pred_region
          _
        $region28: #{transformer_forward.1} parent=11 // pred_fallthru
          _
        // Predicated region
        $region29: #{transformer_forward.1} parent=11 // pred_check
          %p464 = pneg %p395
        $region30: #{transformer_forward.1} parent=11 // pred_check_branch
          %466 = sbr.rel (%p464) target = $region32
        $region31: #{transformer_forward.1} parent=11 // pred_region
          %468 = vsyncadd [#allocation10], 0
          %s469 = sshll.u32 %s14, 4
          %s470 = int_to_ptr.hbm [resolvable:$true] %s469
          %s471 = sshll.u32 [#allocation9], 4
          %s472 = int_to_ptr.vmem [resolvable:$true] %s471
          %477 = dma.hbm_to_vmem [thread:$0]  %s470, 2048, %s472, [#allocation10], 128, 128, 8
        $region32: #{transformer_forward.1} parent=11 // pred_fallthru
          _
        // Predicated region
        $region33: #{transformer_forward.1} parent=11 // pred_check
          %p478 = pneg %p416
        $region34: #{transformer_forward.1} parent=11 // pred_check_branch
          %480 = sbr.rel (%p478) target = $region36
        $region35: #{transformer_forward.1} parent=11 // pred_region
          _
        $region36: #{transformer_forward.1} parent=11 // pred_fallthru
          _
      $region12: #{transformer_forward.1} parent=5 // pred_fallthru
        _
      %p481 = scmp.lt.s32.totalorder %s30, 2
      // Predicated region
      $region37: #{transformer_forward.1} parent=5 // pred_check
        %p482 = pneg %p481
      $region38: #{transformer_forward.1} parent=5 // pred_check_branch
        %484 = sbr.rel (%p482) target = $region40
      $region39: #{transformer_forward.1} parent=5 // pred_region
        // Predicated region
        $region41: #{transformer_forward.1} parent=39 // pred_check
          %p485 = pneg %p92
        $region42: #{transformer_forward.1} parent=39 // pred_check_branch
          %487 = sbr.rel (%p485) target = $region44
        $region43: #{transformer_forward.1} parent=39 // pred_region
          %p488 = scmp.lt.s32.totalorder %s30, 1
          %s489 = scalar_select %p488, %s30, 1
          %s490 = scalar_lea.vmem %s2, %s489
        $region44: #{transformer_forward.1} parent=39 // pred_fallthru
          _
        // Predicated region
        $region45: #{transformer_forward.1} parent=39 // pred_check
          %p491 = pneg %p118
        $region46: #{transformer_forward.1} parent=39 // pred_check_branch
          %493 = sbr.rel (%p491) target = $region48
        $region47: #{transformer_forward.1} parent=39 // pred_region
          %p494 = scmp.lt.s32.totalorder %s30, 1
          %s495 = scalar_select %p494, %s30, 1
          %s496 = scalar_lea.vmem %s3, %s495
        $region48: #{transformer_forward.1} parent=39 // pred_fallthru
          _
        // Predicated region
        $region49: #{transformer_forward.1} parent=39 // pred_check
          %p497 = pneg %p144
        $region50: #{transformer_forward.1} parent=39 // pred_check_branch
          %499 = sbr.rel (%p497) target = $region52
        $region51: #{transformer_forward.1} parent=39 // pred_region
          %s500 = sand.u32 %s134, 1
          %s501 = scalar_lea.sflag [#allocation4], %s500
          %s502 = sand.u32 %s134, 1
          %s503 = smul.addr %s502, 384
          %s504 = scalar_lea.vmem [#allocation3], %s503
          %506 = vsyncadd %s501, 0
          %s507 = smul.addr %s30, 48
          %s508 = smul.addr %s507, 8
          %s509 = scalar_lea.hbm %s4, %s508
          %s510 = sshll.u32 %s509, 4
          %s511 = int_to_ptr.hbm [resolvable:$true] %s510
          %s512 = sshll.u32 %s504, 4
          %s513 = int_to_ptr.vmem [resolvable:$true] %s512
          %518 = dma.hbm_to_vmem [thread:$0]  %s511, 6144, %s513, %s501, 384, 384, 24
        $region52: #{transformer_forward.1} parent=39 // pred_fallthru
          _
        // Predicated region
        $region53: #{transformer_forward.1} parent=39 // pred_check
          %p519 = pneg %p170
        $region54: #{transformer_forward.1} parent=39 // pred_check_branch
          %521 = sbr.rel (%p519) target = $region56
        $region55: #{transformer_forward.1} parent=39 // pred_region
          %p522 = scmp.lt.s32.totalorder %s30, 1
          %s523 = scalar_select %p522, %s30, 1
          %s524 = smul.addr %s523, 16
          %s525 = smul.addr %s524, 8
          %s526 = scalar_lea.vmem %s5, %s525
        $region56: #{transformer_forward.1} parent=39 // pred_fallthru
          _
        // Predicated region
        $region57: #{transformer_forward.1} parent=39 // pred_check
          %p527 = pneg %p196
        $region58: #{transformer_forward.1} parent=39 // pred_check_branch
          %529 = sbr.rel (%p527) target = $region60
        $region59: #{transformer_forward.1} parent=39 // pred_region
          %p530 = scmp.lt.s32.totalorder %s30, 1
          %s531 = scalar_select %p530, %s30, 1
          %s532 = scalar_lea.vmem %s6, %s531
        $region60: #{transformer_forward.1} parent=39 // pred_fallthru
          _
        // Predicated region
        $region61: #{transformer_forward.1} parent=39 // pred_check
          %p533 = pneg %p222
        $region62: #{transformer_forward.1} parent=39 // pred_check_branch
          %535 = sbr.rel (%p533) target = $region64
        $region63: #{transformer_forward.1} parent=39 // pred_region
          %p536 = scmp.lt.s32.totalorder %s30, 1
          %s537 = scalar_select %p536, %s30, 1
          %s538 = scalar_lea.vmem %s7, %s537
        $region64: #{transformer_forward.1} parent=39 // pred_fallthru
          _
        // Predicated region
        $region65: #{transformer_forward.1} parent=39 // pred_check
          %p539 = pneg %p248
        $region66: #{transformer_forward.1} parent=39 // pred_check_branch
          %541 = sbr.rel (%p539) target = $region68
        $region67: #{transformer_forward.1} parent=39 // pred_region
          %s542 = sand.u32 %s30, 1
          %s543 = scalar_lea.sflag [#allocation7], %s542
          %s544 = sand.u32 %s238, 1
          %s545 = smul.addr %s544, 512
          %s546 = scalar_lea.vmem [#allocation6], %s545
          %548 = vsyncadd %s543, 0
          %s549 = smul.addr %s30, 64
          %s550 = smul.addr %s549, 8
          %s551 = scalar_lea.hbm %s8, %s550
          %s552 = sshll.u32 %s551, 4
          %s553 = int_to_ptr.hbm [resolvable:$true] %s552
          %s554 = sshll.u32 %s546, 4
          %s555 = int_to_ptr.vmem [resolvable:$true] %s554
          %560 = dma.hbm_to_vmem [thread:$0]  %s553, 8192, %s555, %s543, 512, 512, 32
        $region68: #{transformer_forward.1} parent=39 // pred_fallthru
          _
        // Predicated region
        $region69: #{transformer_forward.1} parent=39 // pred_check
          %p561 = pneg %p274
        $region70: #{transformer_forward.1} parent=39 // pred_check_branch
          %563 = sbr.rel (%p561) target = $region72
        $region71: #{transformer_forward.1} parent=39 // pred_region
          %p564 = scmp.lt.s32.totalorder %s30, 1
          %s565 = scalar_select %p564, %s30, 1
          %s566 = smul.addr %s565, 4
          %s567 = scalar_lea.vmem %s9, %s566
        $region72: #{transformer_forward.1} parent=39 // pred_fallthru
          _
        // Predicated region
        $region73: #{transformer_forward.1} parent=39 // pred_check
          %p568 = pneg %p300
        $region74: #{transformer_forward.1} parent=39 // pred_check_branch
          %570 = sbr.rel (%p568) target = $region76
        $region75: #{transformer_forward.1} parent=39 // pred_region
          %s571 = sand.u32 %s30, 1
          %s572 = scalar_lea.sflag [#allocation7], %s571
          %s573 = sand.u32 %s290, 1
          %s574 = smul.addr %s573, 512
          %s575 = scalar_lea.vmem [#allocation8], %s574
          %577 = vsyncadd %s572, 0
          %s578 = smul.addr %s30, 64
          %s579 = smul.addr %s578, 8
          %s580 = scalar_lea.hbm %s10, %s579
          %s581 = sshll.u32 %s580, 4
          %s582 = int_to_ptr.hbm [resolvable:$true] %s581
          %s583 = sshll.u32 %s575, 4
          %s584 = int_to_ptr.vmem [resolvable:$true] %s583
          %589 = dma.hbm_to_vmem [thread:$0]  %s582, 8192, %s584, %s572, 128, 128, 8
        $region76: #{transformer_forward.1} parent=39 // pred_fallthru
          _
        // Predicated region
        $region77: #{transformer_forward.1} parent=39 // pred_check
          %p590 = pneg %p326
        $region78: #{transformer_forward.1} parent=39 // pred_check_branch
          %592 = sbr.rel (%p590) target = $region80
        $region79: #{transformer_forward.1} parent=39 // pred_region
          %p593 = scmp.lt.s32.totalorder %s30, 1
          %s594 = scalar_select %p593, %s30, 1
          %s595 = scalar_lea.vmem %s11, %s594
        $region80: #{transformer_forward.1} parent=39 // pred_fallthru
          _
      $region40: #{transformer_forward.1} parent=5 // pred_fallthru
        _
      %p596 = scmp.le.s32.totalorder 1, %s30
      %p597 = scmp.lt.s32.totalorder %s30, 3
      %p598 = pnand %p596, %p597
      %p599 = pneg %p598
      // Predicated region
      $region81: #{transformer_forward.1} parent=5 // pred_check
        _
      $region82: #{transformer_forward.1} parent=5 // pred_check_branch
        %601 = sbr.rel (%p598) target = $region84
      $region83: #{transformer_forward.1} parent=5 // pred_region
        %s602 = ssub.s32 %s30, 1
        %s603 = sand.u32 %s137, 1
        %s604 = scalar_lea.sflag [#allocation4], %s603
        %s605 = sand.u32 %s137, 1
        %s606 = smul.addr %s605, 384
        %s607 = scalar_lea.vmem [#allocation3], %s606
        // Predicated region
        $region85: #{transformer_forward.1} parent=83 // pred_check
          %p608 = pneg %p150
        $region86: #{transformer_forward.1} parent=83 // pred_check_branch
          %610 = sbr.rel (%p608) target = $region88
        $region87: #{transformer_forward.1} parent=83 // pred_region
          %612 = dma.done %s604, 6144
        $region88: #{transformer_forward.1} parent=83 // pred_fallthru
          _
        %s613 = sand.u32 %s35, 1
        %s614 = scalar_lea.sflag [#allocation7], %s613
        %s615 = sand.u32 %s241, 1
        %s616 = smul.addr %s615, 512
        %s617 = scalar_lea.vmem [#allocation6], %s616
        // Predicated region
        $region89: #{transformer_forward.1} parent=83 // pred_check
          %p618 = pneg %p254
        $region90: #{transformer_forward.1} parent=83 // pred_check_branch
          %620 = sbr.rel (%p618) target = $region92
        $region91: #{transformer_forward.1} parent=83 // pred_region
          %622 = dma.done %s614, 8192
        $region92: #{transformer_forward.1} parent=83 // pred_fallthru
          _
        %s623 = sand.u32 %s35, 1
        %s624 = scalar_lea.sflag [#allocation7], %s623
        %s625 = sand.u32 %s293, 1
        %s626 = smul.addr %s625, 512
        %s627 = scalar_lea.vmem [#allocation8], %s626
        // Predicated region
        $region93: #{transformer_forward.1} parent=83 // pred_check
          %p628 = pneg %p306
        $region94: #{transformer_forward.1} parent=83 // pred_check_branch
          %630 = sbr.rel (%p628) target = $region96
        $region95: #{transformer_forward.1} parent=83 // pred_region
          %632 = dma.done %s624, 8192
        $region96: #{transformer_forward.1} parent=83 // pred_fallthru
          _
        // Predicated region
        $region97: #{transformer_forward.1} parent=83 // pred_check
          %p633 = pneg %p395
        $region98: #{transformer_forward.1} parent=83 // pred_check_branch
          %635 = sbr.rel (%p633) target = $region100
        $region99: #{transformer_forward.1} parent=83 // pred_region
          %637 = dma.done [#allocation10], 2048
        $region100: #{transformer_forward.1} parent=83 // pred_fallthru
          _
        %p638 = pneg %p51
        %p639 = pneg %p48
        %p640 = pneg %p72
        %p641 = pneg %p69
        %p642 = scmp.lt.s32.totalorder %s35, 1
        %s643 = scalar_select %p642, %s35, 1
        %s644 = scalar_lea.vmem %s2, %s643
        %p645 = pneg %p98
        %p646 = pneg %p95
        %p647 = scmp.lt.s32.totalorder %s35, 1
        %s648 = scalar_select %p647, %s35, 1
        %s649 = scalar_lea.vmem %s3, %s648
        %p650 = pneg %p124
        %p651 = pneg %p121
        %s652 = sand.u32 %s137, 1
        %s653 = scalar_lea.sflag [#allocation4], %s652
        %s654 = sand.u32 %s137, 1
        %s655 = smul.addr %s654, 384
        %s656 = scalar_lea.vmem [#allocation3], %s655
        %p657 = pneg %p150
        %p658 = pneg %p147
        %p659 = scmp.lt.s32.totalorder %s35, 1
        %s660 = scalar_select %p659, %s35, 1
        %s661 = smul.addr %s660, 16
        %s662 = smul.addr %s661, 8
        %s663 = scalar_lea.vmem %s5, %s662
        %p664 = pneg %p176
        %p665 = pneg %p173
        %p666 = scmp.lt.s32.totalorder %s35, 1
        %s667 = scalar_select %p666, %s35, 1
        %s668 = scalar_lea.vmem %s6, %s667
        %p669 = pneg %p202
        %p670 = pneg %p199
        %p671 = scmp.lt.s32.totalorder %s35, 1
        %s672 = scalar_select %p671, %s35, 1
        %s673 = scalar_lea.vmem %s7, %s672
        %p674 = pneg %p228
        %p675 = pneg %p225
        %s676 = sand.u32 %s35, 1
        %s677 = scalar_lea.sflag [#allocation7], %s676
        %s678 = sand.u32 %s241, 1
        %s679 = smul.addr %s678, 512
        %s680 = scalar_lea.vmem [#allocation6], %s679
        %p681 = pneg %p254
        %p682 = pneg %p251
        %p683 = scmp.lt.s32.totalorder %s35, 1
        %s684 = scalar_select %p683, %s35, 1
        %s685 = smul.addr %s684, 4
        %s686 = scalar_lea.vmem %s9, %s685
        %p687 = pneg %p280
        %p688 = pneg %p277
        %s689 = sand.u32 %s35, 1
        %s690 = scalar_lea.sflag [#allocation7], %s689
        %s691 = sand.u32 %s293, 1
        %s692 = smul.addr %s691, 512
        %s693 = scalar_lea.vmem [#allocation8], %s692
        %p694 = pneg %p306
        %p695 = pneg %p303
        %p696 = scmp.lt.s32.totalorder %s35, 1
        %s697 = scalar_select %p696, %s35, 1
        %s698 = scalar_lea.vmem %s11, %s697
        %p699 = pneg %p332
        %p700 = pneg %p329
        %p701 = pneg %p353
        %p702 = pneg %p350
        %p703 = pneg %p374
        %p704 = pneg %p371
        %p705 = pneg %p395
        %p706 = pneg %p392
        %p707 = pneg %p416
        %p708 = pneg %p413
        %p709 = pneg %p437
        %p710 = pneg %p434
        %p711 = scmp.lt.s32.totalorder %s35, 1
        %s712 = scalar_select %p711, %s35, 1
        %s713 = scalar_lea.vmem %s2, %s712
        %p714 = scmp.lt.s32.totalorder %s35, 1
        %s715 = scalar_select %p714, %s35, 1
        %s716 = scalar_lea.vmem %s3, %s715
        %p717 = scmp.lt.s32.totalorder %s35, 1
        %s718 = scalar_select %p717, %s35, 1
        %s719 = smul.addr %s718, 16
        %s720 = smul.addr %s719, 8
        %s721 = scalar_lea.vmem %s5, %s720
        %p722 = scmp.lt.s32.totalorder %s35, 1
        %s723 = scalar_select %p722, %s35, 1
        %s724 = scalar_lea.vmem %s6, %s723
        %p725 = scmp.lt.s32.totalorder %s35, 1
        %s726 = scalar_select %p725, %s35, 1
        %s727 = scalar_lea.vmem %s7, %s726
        %p728 = scmp.lt.s32.totalorder %s35, 1
        %s729 = scalar_select %p728, %s35, 1
        %s730 = smul.addr %s729, 4
        %s731 = scalar_lea.vmem %s9, %s730
        %p732 = scmp.lt.s32.totalorder %s35, 1
        %s733 = scalar_select %p732, %s35, 1
        %s734 = scalar_lea.vmem %s11, %s733
        %p735 = scmp.eq.s32.totalorder %s35, 0
        // Predicated region
        $region101: #{transformer_forward.1} parent=83 // pred_check
          %p736 = pneg %p735
        $region102: #{transformer_forward.1} parent=83 // pred_check_branch
          %738 = sbr.rel (%p736) target = $region104
        $region103: #{transformer_forward.1} parent=83 // pred_region
          %v739 = vld [vmem:[%s0] sm:$0xff]
          %v740 = vld [vmem:[%s0 + $0x8] sm:$0xff]
          %v741 = vld [vmem:[%s0 + $0x10] sm:$0xff]
          %v742 = vld [vmem:[%s0 + $0x18] sm:$0xff]
          %743 = vst [vmem:[#allocation2] sm:$0xff] %v739
          %744 = vst [vmem:[#allocation2 + $0x8] sm:$0xff] %v740
          %745 = vst [vmem:[#allocation2 + $0x10] sm:$0xff] %v741
          %746 = vst [vmem:[#allocation2 + $0x18] sm:$0xff] %v742
        $region104: #{transformer_forward.1} parent=83 // pred_fallthru
          _
        %v747 = vld [vmem:[#allocation2] sm:$0xff]
        %v748 = vld [vmem:[#allocation2 + $0x8] sm:$0xff]
        %v749 = vld [vmem:[#allocation2 + $0x10] sm:$0xff]
        %v750 = vld [vmem:[#allocation2 + $0x18] sm:$0xff]
        %v751 = vld [vmem:[%s713] sm:$0x1]
        %v752 = vld [vmem:[%s716] sm:$0x1]
        %753 = vadd.xlane.f32.xlu0 %v747
        %v754 = vpop.xlane.xlu0 %753
        %755 = vadd.xlane.f32.xlu0 %v748
        %v756 = vpop.xlane.xlu0 %755
        %757 = vadd.xlane.f32.xlu0 %v749
        %v758 = vpop.xlane.xlu0 %757
        %759 = vadd.xlane.f32.xlu0 %v750
        %v760 = vpop.xlane.xlu0 %759
        %v761 = vrcp.pop 128.0
        %v762 = vmul.f32 128.0, %v761
        %v763 = vsub.f32 1.0, %v762
        %v764 = vmul.f32 %v761, %v763
        %v765 = vadd.f32 %v761, %v764
        %vm766 = vweird.f32 %v761
        %v767 = vsel %vm766, %v761, %v765
        %v768 = vmul.f32 %v754, %v767
        %v769 = vmul.f32 %v756, %v767
        %v770 = vmul.f32 %v758, %v767
        %v771 = vmul.f32 %v760, %v767
        %v772 = vsub.f32 %v747, %v768
        %v773 = vsub.f32 %v748, %v769
        %v774 = vsub.f32 %v749, %v770
        %v775 = vsub.f32 %v750, %v771
        %v776 = vmul.f32 %v772, %v772
        %v777 = vmul.f32 %v773, %v773
        %v778 = vmul.f32 %v774, %v774
        %v779 = vmul.f32 %v775, %v775
        %780 = vadd.xlane.f32.xlu0 %v776
        %v781 = vpop.xlane.xlu0 %780
        %782 = vadd.xlane.f32.xlu0 %v777
        %v783 = vpop.xlane.xlu0 %782
        %784 = vadd.xlane.f32.xlu0 %v778
        %v785 = vpop.xlane.xlu0 %784
        %786 = vadd.xlane.f32.xlu0 %v779
        %v787 = vpop.xlane.xlu0 %786
        %v788 = vmul.f32 %v781, %v767
        %v789 = vmul.f32 %v783, %v767
        %v790 = vmul.f32 %v785, %v767
        %v791 = vmul.f32 %v787, %v767
        %v792 = vadd.f32 %v788, 1e-05
        %v793 = vadd.f32 %v789, 1e-05
        %v794 = vadd.f32 %v790, 1e-05
        %v795 = vadd.f32 %v791, 1e-05
        %v796 = vrsqrt.pop %v792
        %v797 = vmul.f32 %v796, %v792
        %v798 = vmul.f32 %v797, %v796
        %v799 = vmul.f32 0.5, %v798
        %v800 = vsub.f32 1.5, %v799
        %v801 = vmul.f32 %v796, %v800
        %vm802 = vweird.f32 %v792
        %vm803 = vweird.f32 %v796
        %vm804 = vmor %vm802, %vm803
        %v805 = vsel %vm804, %v796, %v801
        %v806 = vrsqrt.pop %v793
        %v807 = vmul.f32 %v806, %v793
        %v808 = vmul.f32 %v807, %v806
        %v809 = vmul.f32 0.5, %v808
        %v810 = vsub.f32 1.5, %v809
        %v811 = vmul.f32 %v806, %v810
        %vm812 = vweird.f32 %v793
        %vm813 = vweird.f32 %v806
        %vm814 = vmor %vm812, %vm813
        %v815 = vsel %vm814, %v806, %v811
        %v816 = vrsqrt.pop %v794
        %v817 = vmul.f32 %v816, %v794
        %v818 = vmul.f32 %v817, %v816
        %v819 = vmul.f32 0.5, %v818
        %v820 = vsub.f32 1.5, %v819
        %v821 = vmul.f32 %v816, %v820
        %vm822 = vweird.f32 %v794
        %vm823 = vweird.f32 %v816
        %vm824 = vmor %vm822, %vm823
        %v825 = vsel %vm824, %v816, %v821
        %v826 = vrsqrt.pop %v795
        %v827 = vmul.f32 %v826, %v795
        %v828 = vmul.f32 %v827, %v826
        %v829 = vmul.f32 0.5, %v828
        %v830 = vsub.f32 1.5, %v829
        %v831 = vmul.f32 %v826, %v830
        %vm832 = vweird.f32 %v795
        %vm833 = vweird.f32 %v826
        %vm834 = vmor %vm832, %vm833
        %v835 = vsel %vm834, %v826, %v831
        %v836 = vmul.f32 %v772, %v805
        %v837 = vmul.f32 %v773, %v815
        %v838 = vmul.f32 %v774, %v825
        %v839 = vmul.f32 %v775, %v835
        %v841 = vperm.slane %v751, 0
        %v843 = vmul.f32 %v836, %v841
        %v844 = vmul.f32 %v837, %v841
        %v845 = vmul.f32 %v838, %v841
        %v846 = vmul.f32 %v839, %v841
        %v848 = vperm.slane %v752, 0
        %v850 = vadd.f32 %v843, %v848
        %v851 = vadd.f32 %v844, %v848
        %v852 = vadd.f32 %v845, %v848
        %v853 = vadd.f32 %v846, %v848
        %v854 = vld [vmem:[%s607] sm:$0xff]
        %v855 = vld [vmem:[%s607 + $0x8] sm:$0xff]
        %v856 = vld [vmem:[%s607 + $0x10] sm:$0xff]
        %v857 = vld [vmem:[%s607 + $0x18] sm:$0xff]
        %v858 = vld [vmem:[%s607 + $0x20] sm:$0xff]
        %v859 = vld [vmem:[%s607 + $0x28] sm:$0xff]
        %v860 = vld [vmem:[%s607 + $0x30] sm:$0xff]
        %v861 = vld [vmem:[%s607 + $0x38] sm:$0xff]
        %v862 = vld [vmem:[%s607 + $0x40] sm:$0xff]
        %v863 = vld [vmem:[%s607 + $0x48] sm:$0xff]
        %v864 = vld [vmem:[%s607 + $0x50] sm:$0xff]
        %v865 = vld [vmem:[%s607 + $0x58] sm:$0xff]
        %v866 = vld [vmem:[%s607 + $0x60] sm:$0xff]
        %v867 = vld [vmem:[%s607 + $0x68] sm:$0xff]
        %v868 = vld [vmem:[%s607 + $0x70] sm:$0xff]
        %v869 = vld [vmem:[%s607 + $0x78] sm:$0xff]
        %v870 = vld [vmem:[%s607 + $0x80] sm:$0xff]
        %v871 = vld [vmem:[%s607 + $0x88] sm:$0xff]
        %v872 = vld [vmem:[%s607 + $0x90] sm:$0xff]
        %v873 = vld [vmem:[%s607 + $0x98] sm:$0xff]
        %v874 = vld [vmem:[%s607 + $0xa0] sm:$0xff]
        %v875 = vld [vmem:[%s607 + $0xa8] sm:$0xff]
        %v876 = vld [vmem:[%s607 + $0xb0] sm:$0xff]
        %v877 = vld [vmem:[%s607 + $0xb8] sm:$0xff]
        %v878 = vld [vmem:[%s607 + $0xc0] sm:$0xff]
        %v879 = vld [vmem:[%s607 + $0xc8] sm:$0xff]
        %v880 = vld [vmem:[%s607 + $0xd0] sm:$0xff]
        %v881 = vld [vmem:[%s607 + $0xd8] sm:$0xff]
        %v882 = vld [vmem:[%s607 + $0xe0] sm:$0xff]
        %v883 = vld [vmem:[%s607 + $0xe8] sm:$0xff]
        %v884 = vld [vmem:[%s607 + $0xf0] sm:$0xff]
        %v885 = vld [vmem:[%s607 + $0xf8] sm:$0xff]
        %v886 = vld [vmem:[%s607 + $0x100] sm:$0xff]
        %v887 = vld [vmem:[%s607 + $0x108] sm:$0xff]
        %v888 = vld [vmem:[%s607 + $0x110] sm:$0xff]
        %v889 = vld [vmem:[%s607 + $0x118] sm:$0xff]
        %v890 = vld [vmem:[%s607 + $0x120] sm:$0xff]
        %v891 = vld [vmem:[%s607 + $0x128] sm:$0xff]
        %v892 = vld [vmem:[%s607 + $0x130] sm:$0xff]
        %v893 = vld [vmem:[%s607 + $0x138] sm:$0xff]
        %v894 = vld [vmem:[%s607 + $0x140] sm:$0xff]
        %v895 = vld [vmem:[%s607 + $0x148] sm:$0xff]
        %v896 = vld [vmem:[%s607 + $0x150] sm:$0xff]
        %v897 = vld [vmem:[%s607 + $0x158] sm:$0xff]
        %v898 = vld [vmem:[%s607 + $0x160] sm:$0xff]
        %v899 = vld [vmem:[%s607 + $0x168] sm:$0xff]
        %v900 = vld [vmem:[%s607 + $0x170] sm:$0xff]
        %v901 = vld [vmem:[%s607 + $0x178] sm:$0xff]
        %902 = vmatpush.msra.mxu0 %v899
        %903 = vmatpush.msra.mxu0 %v896
        %904 = vmatpush.msra.mxu0 %v893
        %905 = vmatpush.msra.mxu0 %v890
        %906 = vmatpush.msra.mxu0 %v887
        %907 = vmatpush.msra.mxu0 %v884
        %908 = vmatpush.msra.mxu0 %v881
        %909 = vmatpush.msra.mxu0 %v878
        %910 = vmatpush.msra.mxu0 %v875
        %911 = vmatpush.msra.mxu0 %v872
        %912 = vmatpush.msra.mxu0 %v869
        %913 = vmatpush.msra.mxu0 %v866
        %914 = vmatpush.msra.mxu0 %v863
        %915 = vmatpush.msra.mxu0 %v860
        %916 = vmatpush.msra.mxu0 %v857
        %917 = vmatpush.msra.mxu0 %v854
        %918 = vmatmul.f32.gmra.mxu0 %v850
        %v919 = vpop.f32.mrf.mxu0
        %v920 = vadd.f32 0.0, %v919
        %921 = vmatmul.f32.gmra.mxu0 %v851
        %v922 = vpop.f32.mrf.mxu0
        %v923 = vadd.f32 0.0, %v922
        %924 = vmatmul.f32.gmra.mxu0 %v852
        %v925 = vpop.f32.mrf.mxu0
        %v926 = vadd.f32 0.0, %v925
        %927 = vmatmul.f32.gmra.mxu0 %v853
        %v928 = vpop.f32.mrf.mxu0
        %v929 = vadd.f32 0.0, %v928
        %930 = vdwg.mxu0
        %931 = vmatpush.msra.mxu0 %v900
        %932 = vmatpush.msra.mxu0 %v897
        %933 = vmatpush.msra.mxu0 %v894
        %934 = vmatpush.msra.mxu0 %v891
        %935 = vmatpush.msra.mxu0 %v888
        %936 = vmatpush.msra.mxu0 %v885
        %937 = vmatpush.msra.mxu0 %v882
        %938 = vmatpush.msra.mxu0 %v879
        %939 = vmatpush.msra.mxu0 %v876
        %940 = vmatpush.msra.mxu0 %v873
        %941 = vmatpush.msra.mxu0 %v870
        %942 = vmatpush.msra.mxu0 %v867
        %943 = vmatpush.msra.mxu0 %v864
        %944 = vmatpush.msra.mxu0 %v861
        %945 = vmatpush.msra.mxu0 %v858
        %946 = vmatpush.msra.mxu0 %v855
        %947 = vmatmul.f32.gmra.mxu0 %v850
        %v948 = vpop.f32.mrf.mxu0
        %v949 = vadd.f32 0.0, %v948
        %950 = vmatmul.f32.gmra.mxu0 %v851
        %v951 = vpop.f32.mrf.mxu0
        %v952 = vadd.f32 0.0, %v951
        %953 = vmatmul.f32.gmra.mxu0 %v852
        %v954 = vpop.f32.mrf.mxu0
        %v955 = vadd.f32 0.0, %v954
        %956 = vmatmul.f32.gmra.mxu0 %v853
        %v957 = vpop.f32.mrf.mxu0
        %v958 = vadd.f32 0.0, %v957
        %959 = vdwg.mxu0
        %960 = vmatpush.msra.mxu0 %v901
        %961 = vmatpush.msra.mxu0 %v898
        %962 = vmatpush.msra.mxu0 %v895
        %963 = vmatpush.msra.mxu0 %v892
        %964 = vmatpush.msra.mxu0 %v889
        %965 = vmatpush.msra.mxu0 %v886
        %966 = vmatpush.msra.mxu0 %v883
        %967 = vmatpush.msra.mxu0 %v880
        %968 = vmatpush.msra.mxu0 %v877
        %969 = vmatpush.msra.mxu0 %v874
        %970 = vmatpush.msra.mxu0 %v871
        %971 = vmatpush.msra.mxu0 %v868
        %972 = vmatpush.msra.mxu0 %v865
        %973 = vmatpush.msra.mxu0 %v862
        %974 = vmatpush.msra.mxu0 %v859
        %975 = vmatpush.msra.mxu0 %v856
        %976 = vmatmul.f32.gmra.mxu0 %v850
        %v977 = vpop.f32.mrf.mxu0
        %v978 = vadd.f32 0.0, %v977
        %979 = vmatmul.f32.gmra.mxu0 %v851
        %v980 = vpop.f32.mrf.mxu0
        %v981 = vadd.f32 0.0, %v980
        %982 = vmatmul.f32.gmra.mxu0 %v852
        %v983 = vpop.f32.mrf.mxu0
        %v984 = vadd.f32 0.0, %v983
        %985 = vmatmul.f32.gmra.mxu0 %v853
        %v986 = vpop.f32.mrf.mxu0
        %v987 = vadd.f32 0.0, %v986
        %988 = vdwg.mxu0
        %993 = vrot.lane.b32.xlu0 %v920, 96
        %v994 = vpop.permute.xlu0 %993
        %995 = vrot.lane.b32.xlu0 %v923, 96
        %v996 = vpop.permute.xlu0 %995
        %997 = vrot.lane.b32.xlu0 %v926, 96
        %v998 = vpop.permute.xlu0 %997
        %999 = vrot.lane.b32.xlu0 %v929, 96
        %v1000 = vpop.permute.xlu0 %999
        %1001 = vrot.lane.b32.xlu0 %v920, 64
        %v1002 = vpop.permute.xlu0 %1001
        %1003 = vrot.lane.b32.xlu0 %v923, 64
        %v1004 = vpop.permute.xlu0 %1003
        %1005 = vrot.lane.b32.xlu0 %v926, 64
        %v1006 = vpop.permute.xlu0 %1005
        %1007 = vrot.lane.b32.xlu0 %v929, 64
        %v1008 = vpop.permute.xlu0 %1007
        %1009 = vrot.lane.b32.xlu0 %v920, 32
        %v1010 = vpop.permute.xlu0 %1009
        %1011 = vrot.lane.b32.xlu0 %v923, 32
        %v1012 = vpop.permute.xlu0 %1011
        %1013 = vrot.lane.b32.xlu0 %v926, 32
        %v1014 = vpop.permute.xlu0 %1013
        %1015 = vrot.lane.b32.xlu0 %v929, 32
        %v1016 = vpop.permute.xlu0 %1015
        %1021 = vrot.lane.b32.xlu0 %v949, 96
        %v1022 = vpop.permute.xlu0 %1021
        %1023 = vrot.lane.b32.xlu0 %v952, 96
        %v1024 = vpop.permute.xlu0 %1023
        %1025 = vrot.lane.b32.xlu0 %v955, 96
        %v1026 = vpop.permute.xlu0 %1025
        %1027 = vrot.lane.b32.xlu0 %v958, 96
        %v1028 = vpop.permute.xlu0 %1027
        %1029 = vrot.lane.b32.xlu0 %v949, 64
        %v1030 = vpop.permute.xlu0 %1029
        %1031 = vrot.lane.b32.xlu0 %v952, 64
        %v1032 = vpop.permute.xlu0 %1031
        %1033 = vrot.lane.b32.xlu0 %v955, 64
        %v1034 = vpop.permute.xlu0 %1033
        %1035 = vrot.lane.b32.xlu0 %v958, 64
        %v1036 = vpop.permute.xlu0 %1035
        %1037 = vrot.lane.b32.xlu0 %v949, 32
        %v1038 = vpop.permute.xlu0 %1037
        %1039 = vrot.lane.b32.xlu0 %v952, 32
        %v1040 = vpop.permute.xlu0 %1039
        %1041 = vrot.lane.b32.xlu0 %v955, 32
        %v1042 = vpop.permute.xlu0 %1041
        %1043 = vrot.lane.b32.xlu0 %v958, 32
        %v1044 = vpop.permute.xlu0 %1043
        %1049 = vrot.lane.b32.xlu0 %v978, 96
        %v1050 = vpop.permute.xlu0 %1049
        %1051 = vrot.lane.b32.xlu0 %v981, 96
        %v1052 = vpop.permute.xlu0 %1051
        %1053 = vrot.lane.b32.xlu0 %v984, 96
        %v1054 = vpop.permute.xlu0 %1053
        %1055 = vrot.lane.b32.xlu0 %v987, 96
        %v1056 = vpop.permute.xlu0 %1055
        %1061 = vrot.lane.b32.xlu0 %v978, 64
        %v1062 = vpop.permute.xlu0 %1061
        %1063 = vrot.lane.b32.xlu0 %v981, 64
        %v1064 = vpop.permute.xlu0 %1063
        %1065 = vrot.lane.b32.xlu0 %v984, 64
        %v1066 = vpop.permute.xlu0 %1065
        %1067 = vrot.lane.b32.xlu0 %v987, 64
        %v1068 = vpop.permute.xlu0 %1067
        %1073 = vrot.lane.b32.xlu0 %v978, 32
        %v1074 = vpop.permute.xlu0 %1073
        %1075 = vrot.lane.b32.xlu0 %v981, 32
        %v1076 = vpop.permute.xlu0 %1075
        %1077 = vrot.lane.b32.xlu0 %v984, 32
        %v1078 = vpop.permute.xlu0 %1077
        %1079 = vrot.lane.b32.xlu0 %v987, 32
        %v1080 = vpop.permute.xlu0 %1079
        %vm1085 = vcmask 261120
        %v1086 = vsel %vm1085, %v920, 0
        %v1088 = vsel %vm1085, %v923, 0
        %v1090 = vsel %vm1085, %v926, 0
        %v1092 = vsel %vm1085, %v929, 0
        %v1094 = vsel %vm1085, %v994, 0
        %v1096 = vsel %vm1085, %v996, 0
        %v1098 = vsel %vm1085, %v998, 0
        %v1100 = vsel %vm1085, %v1000, 0
        %v1102 = vsel %vm1085, %v1002, 0
        %v1104 = vsel %vm1085, %v1004, 0
        %v1106 = vsel %vm1085, %v1006, 0
        %v1108 = vsel %vm1085, %v1008, 0
        %v1110 = vsel %vm1085, %v1010, 0
        %v1112 = vsel %vm1085, %v1012, 0
        %v1114 = vsel %vm1085, %v1014, 0
        %v1116 = vsel %vm1085, %v1016, 0
        %v1118 = vsel %vm1085, %v949, 0
        %v1120 = vsel %vm1085, %v952, 0
        %v1122 = vsel %vm1085, %v955, 0
        %v1124 = vsel %vm1085, %v958, 0
        %v1126 = vsel %vm1085, %v1022, 0
        %v1128 = vsel %vm1085, %v1024, 0
        %v1130 = vsel %vm1085, %v1026, 0
        %v1132 = vsel %vm1085, %v1028, 0
        %v1134 = vsel %vm1085, %v1030, 0
        %v1136 = vsel %vm1085, %v1032, 0
        %v1138 = vsel %vm1085, %v1034, 0
        %v1140 = vsel %vm1085, %v1036, 0
        %v1142 = vsel %vm1085, %v1038, 0
        %v1144 = vsel %vm1085, %v1040, 0
        %v1146 = vsel %vm1085, %v1042, 0
        %v1148 = vsel %vm1085, %v1044, 0
        %1150 = vmatpush.xpose.msra.mxu0 %v1148
        %1151 = vmatpush.xpose.msra.mxu0 %v1146
        %1152 = vmatpush.xpose.msra.mxu0 %v1144
        %1153 = vmatpush.xpose.msra.mxu0 %v1142
        %1154 = vmatpush.xpose.msra.mxu0 %v1140
        %1155 = vmatpush.xpose.msra.mxu0 %v1138
        %1156 = vmatpush.xpose.msra.mxu0 %v1136
        %1157 = vmatpush.xpose.msra.mxu0 %v1134
        %1158 = vmatpush.xpose.msra.mxu0 %v1132
        %1159 = vmatpush.xpose.msra.mxu0 %v1130
        %1160 = vmatpush.xpose.msra.mxu0 %v1128
        %1161 = vmatpush.xpose.msra.mxu0 %v1126
        %1162 = vmatpush.xpose.msra.mxu0 %v1124
        %1163 = vmatpush.xpose.msra.mxu0 %v1122
        %1164 = vmatpush.xpose.msra.mxu0 %v1120
        %1165 = vmatpush.xpose.msra.mxu0 %v1118
        %1166 = vmatmul.f32.gmra.mxu0 %v1086
        %v1167 = vpop.f32.mrf.mxu0
        %v1168 = vadd.f32 0.0, %v1167
        %1169 = vmatmul.f32.gmra.mxu0 %v1088
        %v1170 = vpop.f32.mrf.mxu0
        %v1171 = vadd.f32 0.0, %v1170
        %1172 = vmatmul.f32.gmra.mxu0 %v1090
        %v1173 = vpop.f32.mrf.mxu0
        %v1174 = vadd.f32 0.0, %v1173
        %1175 = vmatmul.f32.gmra.mxu0 %v1092
        %v1176 = vpop.f32.mrf.mxu0
        %v1177 = vadd.f32 0.0, %v1176
        %1178 = vmatmul.f32.gmra.mxu0 %v1094
        %v1179 = vpop.f32.mrf.mxu0
        %v1180 = vadd.f32 0.0, %v1179
        %1181 = vmatmul.f32.gmra.mxu0 %v1096
        %v1182 = vpop.f32.mrf.mxu0
        %v1183 = vadd.f32 0.0, %v1182
        %1184 = vmatmul.f32.gmra.mxu0 %v1098
        %v1185 = vpop.f32.mrf.mxu0
        %v1186 = vadd.f32 0.0, %v1185
        %1187 = vmatmul.f32.gmra.mxu0 %v1100
        %v1188 = vpop.f32.mrf.mxu0
        %v1189 = vadd.f32 0.0, %v1188
        %1190 = vmatmul.f32.gmra.mxu0 %v1102
        %v1191 = vpop.f32.mrf.mxu0
        %v1192 = vadd.f32 0.0, %v1191
        %1193 = vmatmul.f32.gmra.mxu0 %v1104
        %v1194 = vpop.f32.mrf.mxu0
        %v1195 = vadd.f32 0.0, %v1194
        %1196 = vmatmul.f32.gmra.mxu0 %v1106
        %v1197 = vpop.f32.mrf.mxu0
        %v1198 = vadd.f32 0.0, %v1197
        %1199 = vmatmul.f32.gmra.mxu0 %v1108
        %v1200 = vpop.f32.mrf.mxu0
        %v1201 = vadd.f32 0.0, %v1200
        %1202 = vmatmul.f32.gmra.mxu0 %v1110
        %v1203 = vpop.f32.mrf.mxu0
        %v1204 = vadd.f32 0.0, %v1203
        %1205 = vmatmul.f32.gmra.mxu0 %v1112
        %v1206 = vpop.f32.mrf.mxu0
        %v1207 = vadd.f32 0.0, %v1206
        %1208 = vmatmul.f32.gmra.mxu0 %v1114
        %v1209 = vpop.f32.mrf.mxu0
        %v1210 = vadd.f32 0.0, %v1209
        %1211 = vmatmul.f32.gmra.mxu0 %v1116
        %v1212 = vpop.f32.mrf.mxu0
        %v1213 = vadd.f32 0.0, %v1212
        %1214 = vdwg.mxu0
        %v1215 = vmul.f32 %v1168, 0.17677669
        %v1216 = vmul.f32 %v1171, 0.17677669
        %v1217 = vmul.f32 %v1174, 0.17677669
        %v1218 = vmul.f32 %v1177, 0.17677669
        %v1219 = vmul.f32 %v1180, 0.17677669
        %v1220 = vmul.f32 %v1183, 0.17677669
        %v1221 = vmul.f32 %v1186, 0.17677669
        %v1222 = vmul.f32 %v1189, 0.17677669
        %v1223 = vmul.f32 %v1192, 0.17677669
        %v1224 = vmul.f32 %v1195, 0.17677669
        %v1225 = vmul.f32 %v1198, 0.17677669
        %v1226 = vmul.f32 %v1201, 0.17677669
        %v1227 = vmul.f32 %v1204, 0.17677669
        %v1228 = vmul.f32 %v1207, 0.17677669
        %v1229 = vmul.f32 %v1210, 0.17677669
        %v1230 = vmul.f32 %v1213, 0.17677669
        %v1231 = vld [vmem:[%s1] sm:$0xff]
        %v1232 = vld [vmem:[%s1 + $0x8] sm:$0xff]
        %v1233 = vld [vmem:[%s1 + $0x10] sm:$0xff]
        %v1234 = vld [vmem:[%s1 + $0x18] sm:$0xff]
        %v1235 = vld [vmem:[%s1 + $0x20] sm:$0xff]
        %v1236 = vld [vmem:[%s1 + $0x28] sm:$0xff]
        %v1237 = vld [vmem:[%s1 + $0x30] sm:$0xff]
        %v1238 = vld [vmem:[%s1 + $0x38] sm:$0xff]
        %v1239 = vld [vmem:[%s1 + $0x40] sm:$0xff]
        %v1240 = vld [vmem:[%s1 + $0x48] sm:$0xff]
        %v1241 = vld [vmem:[%s1 + $0x50] sm:$0xff]
        %v1242 = vld [vmem:[%s1 + $0x58] sm:$0xff]
        %v1243 = vld [vmem:[%s1 + $0x60] sm:$0xff]
        %v1244 = vld [vmem:[%s1 + $0x68] sm:$0xff]
        %v1245 = vld [vmem:[%s1 + $0x70] sm:$0xff]
        %v1246 = vld [vmem:[%s1 + $0x78] sm:$0xff]
        %v1247 = vadd.f32 %v1215, %v1231
        %v1248 = vadd.f32 %v1216, %v1232
        %v1249 = vadd.f32 %v1217, %v1233
        %v1250 = vadd.f32 %v1218, %v1234
        %v1251 = vadd.f32 %v1219, %v1235
        %v1252 = vadd.f32 %v1220, %v1236
        %v1253 = vadd.f32 %v1221, %v1237
        %v1254 = vadd.f32 %v1222, %v1238
        %v1255 = vadd.f32 %v1223, %v1239
        %v1256 = vadd.f32 %v1224, %v1240
        %v1257 = vadd.f32 %v1225, %v1241
        %v1258 = vadd.f32 %v1226, %v1242
        %v1259 = vadd.f32 %v1227, %v1243
        %v1260 = vadd.f32 %v1228, %v1244
        %v1261 = vadd.f32 %v1229, %v1245
        %v1262 = vadd.f32 %v1230, %v1246
        %1263 = vmax.xlane.f32.xlu0 %v1247
        %v1264 = vpop.xlane.xlu0 %1263
        %1265 = vmax.xlane.f32.xlu0 %v1248
        %v1266 = vpop.xlane.xlu0 %1265
        %1267 = vmax.xlane.f32.xlu0 %v1249
        %v1268 = vpop.xlane.xlu0 %1267
        %1269 = vmax.xlane.f32.xlu0 %v1250
        %v1270 = vpop.xlane.xlu0 %1269
        %1271 = vmax.xlane.f32.xlu0 %v1251
        %v1272 = vpop.xlane.xlu0 %1271
        %1273 = vmax.xlane.f32.xlu0 %v1252
        %v1274 = vpop.xlane.xlu0 %1273
        %1275 = vmax.xlane.f32.xlu0 %v1253
        %v1276 = vpop.xlane.xlu0 %1275
        %1277 = vmax.xlane.f32.xlu0 %v1254
        %v1278 = vpop.xlane.xlu0 %1277
        %1279 = vmax.xlane.f32.xlu0 %v1255
        %v1280 = vpop.xlane.xlu0 %1279
        %1281 = vmax.xlane.f32.xlu0 %v1256
        %v1282 = vpop.xlane.xlu0 %1281
        %1283 = vmax.xlane.f32.xlu0 %v1257
        %v1284 = vpop.xlane.xlu0 %1283
        %1285 = vmax.xlane.f32.xlu0 %v1258
        %v1286 = vpop.xlane.xlu0 %1285
        %1287 = vmax.xlane.f32.xlu0 %v1259
        %v1288 = vpop.xlane.xlu0 %1287
        %1289 = vmax.xlane.f32.xlu0 %v1260
        %v1290 = vpop.xlane.xlu0 %1289
        %1291 = vmax.xlane.f32.xlu0 %v1261
        %v1292 = vpop.xlane.xlu0 %1291
        %1293 = vmax.xlane.f32.xlu0 %v1262
        %v1294 = vpop.xlane.xlu0 %1293
        %v1295 = vsub.f32 %v1247, %v1264
        %v1296 = vsub.f32 %v1248, %v1266
        %v1297 = vsub.f32 %v1249, %v1268
        %v1298 = vsub.f32 %v1250, %v1270
        %v1299 = vsub.f32 %v1251, %v1272
        %v1300 = vsub.f32 %v1252, %v1274
        %v1301 = vsub.f32 %v1253, %v1276
        %v1302 = vsub.f32 %v1254, %v1278
        %v1303 = vsub.f32 %v1255, %v1280
        %v1304 = vsub.f32 %v1256, %v1282
        %v1305 = vsub.f32 %v1257, %v1284
        %v1306 = vsub.f32 %v1258, %v1286
        %v1307 = vsub.f32 %v1259, %v1288
        %v1308 = vsub.f32 %v1260, %v1290
        %v1309 = vsub.f32 %v1261, %v1292
        %v1310 = vsub.f32 %v1262, %v1294
        %v1311 = vmul.f32 %v1295, 1.442695
        %v1312 = vpow.pop %v1311
        %v1313 = vmul.f32 %v1296, 1.442695
        %v1314 = vpow.pop %v1313
        %v1315 = vmul.f32 %v1297, 1.442695
        %v1316 = vpow.pop %v1315
        %v1317 = vmul.f32 %v1298, 1.442695
        %v1318 = vpow.pop %v1317
        %v1319 = vmul.f32 %v1299, 1.442695
        %v1320 = vpow.pop %v1319
        %v1321 = vmul.f32 %v1300, 1.442695
        %v1322 = vpow.pop %v1321
        %v1323 = vmul.f32 %v1301, 1.442695
        %v1324 = vpow.pop %v1323
        %v1325 = vmul.f32 %v1302, 1.442695
        %v1326 = vpow.pop %v1325
        %v1327 = vmul.f32 %v1303, 1.442695
        %v1328 = vpow.pop %v1327
        %v1329 = vmul.f32 %v1304, 1.442695
        %v1330 = vpow.pop %v1329
        %v1331 = vmul.f32 %v1305, 1.442695
        %v1332 = vpow.pop %v1331
        %v1333 = vmul.f32 %v1306, 1.442695
        %v1334 = vpow.pop %v1333
        %v1335 = vmul.f32 %v1307, 1.442695
        %v1336 = vpow.pop %v1335
        %v1337 = vmul.f32 %v1308, 1.442695
        %v1338 = vpow.pop %v1337
        %v1339 = vmul.f32 %v1309, 1.442695
        %v1340 = vpow.pop %v1339
        %v1341 = vmul.f32 %v1310, 1.442695
        %v1342 = vpow.pop %v1341
        %1343 = vadd.xlane.f32.xlu0 %v1312
        %v1344 = vpop.xlane.xlu0 %1343
        %1345 = vadd.xlane.f32.xlu0 %v1314
        %v1346 = vpop.xlane.xlu0 %1345
        %1347 = vadd.xlane.f32.xlu0 %v1316
        %v1348 = vpop.xlane.xlu0 %1347
        %1349 = vadd.xlane.f32.xlu0 %v1318
        %v1350 = vpop.xlane.xlu0 %1349
        %1351 = vadd.xlane.f32.xlu0 %v1320
        %v1352 = vpop.xlane.xlu0 %1351
        %1353 = vadd.xlane.f32.xlu0 %v1322
        %v1354 = vpop.xlane.xlu0 %1353
        %1355 = vadd.xlane.f32.xlu0 %v1324
        %v1356 = vpop.xlane.xlu0 %1355
        %1357 = vadd.xlane.f32.xlu0 %v1326
        %v1358 = vpop.xlane.xlu0 %1357
        %1359 = vadd.xlane.f32.xlu0 %v1328
        %v1360 = vpop.xlane.xlu0 %1359
        %1361 = vadd.xlane.f32.xlu0 %v1330
        %v1362 = vpop.xlane.xlu0 %1361
        %1363 = vadd.xlane.f32.xlu0 %v1332
        %v1364 = vpop.xlane.xlu0 %1363
        %1365 = vadd.xlane.f32.xlu0 %v1334
        %v1366 = vpop.xlane.xlu0 %1365
        %1367 = vadd.xlane.f32.xlu0 %v1336
        %v1368 = vpop.xlane.xlu0 %1367
        %1369 = vadd.xlane.f32.xlu0 %v1338
        %v1370 = vpop.xlane.xlu0 %1369
        %1371 = vadd.xlane.f32.xlu0 %v1340
        %v1372 = vpop.xlane.xlu0 %1371
        %1373 = vadd.xlane.f32.xlu0 %v1342
        %v1374 = vpop.xlane.xlu0 %1373
        %v1375 = vrcp.pop %v1344
        %v1376 = vrcp.pop %v1346
        %v1377 = vrcp.pop %v1348
        %v1378 = vrcp.pop %v1350
        %v1379 = vrcp.pop %v1352
        %v1380 = vrcp.pop %v1354
        %v1381 = vrcp.pop %v1356
        %v1382 = vrcp.pop %v1358
        %v1383 = vrcp.pop %v1360
        %v1384 = vrcp.pop %v1362
        %v1385 = vrcp.pop %v1364
        %v1386 = vrcp.pop %v1366
        %v1387 = vrcp.pop %v1368
        %v1388 = vrcp.pop %v1370
        %v1389 = vrcp.pop %v1372
        %v1390 = vrcp.pop %v1374
        %v1391 = vmul.f32 %v1312, %v1375
        %v1392 = vmul.f32 %v1314, %v1376
        %v1393 = vmul.f32 %v1316, %v1377
        %v1394 = vmul.f32 %v1318, %v1378
        %v1395 = vmul.f32 %v1320, %v1379
        %v1396 = vmul.f32 %v1322, %v1380
        %v1397 = vmul.f32 %v1324, %v1381
        %v1398 = vmul.f32 %v1326, %v1382
        %v1399 = vmul.f32 %v1328, %v1383
        %v1400 = vmul.f32 %v1330, %v1384
        %v1401 = vmul.f32 %v1332, %v1385
        %v1402 = vmul.f32 %v1334, %v1386
        %v1403 = vmul.f32 %v1336, %v1387
        %v1404 = vmul.f32 %v1338, %v1388
        %v1405 = vmul.f32 %v1340, %v1389
        %v1406 = vmul.f32 %v1342, %v1390
        %1407 = vmatpush.msra.mxu0 %v1080
        %1408 = vmatpush.msra.mxu0 %v1078
        %1409 = vmatpush.msra.mxu0 %v1076
        %1410 = vmatpush.msra.mxu0 %v1074
        %1411 = vmatpush.msra.mxu0 %v1068
        %1412 = vmatpush.msra.mxu0 %v1066
        %1413 = vmatpush.msra.mxu0 %v1064
        %1414 = vmatpush.msra.mxu0 %v1062
        %1415 = vmatpush.msra.mxu0 %v1056
        %1416 = vmatpush.msra.mxu0 %v1054
        %1417 = vmatpush.msra.mxu0 %v1052
        %1418 = vmatpush.msra.mxu0 %v1050
        %1419 = vmatpush.msra.mxu0 %v987
        %1420 = vmatpush.msra.mxu0 %v984
        %1421 = vmatpush.msra.mxu0 %v981
        %1422 = vmatpush.msra.mxu0 %v978
        %1423 = vmatmul.f32.gmra.mxu0 %v1391
        %v1424 = vpop.f32.mrf.mxu0
        %v1425 = vadd.f32 0.0, %v1424
        %1426 = vmatmul.f32.gmra.mxu0 %v1392
        %v1427 = vpop.f32.mrf.mxu0
        %v1428 = vadd.f32 0.0, %v1427
        %1429 = vmatmul.f32.gmra.mxu0 %v1393
        %v1430 = vpop.f32.mrf.mxu0
        %v1431 = vadd.f32 0.0, %v1430
        %1432 = vmatmul.f32.gmra.mxu0 %v1394
        %v1433 = vpop.f32.mrf.mxu0
        %v1434 = vadd.f32 0.0, %v1433
        %1435 = vmatmul.f32.gmra.mxu0 %v1395
        %v1436 = vpop.f32.mrf.mxu0
        %v1437 = vadd.f32 0.0, %v1436
        %1438 = vmatmul.f32.gmra.mxu0 %v1396
        %v1439 = vpop.f32.mrf.mxu0
        %v1440 = vadd.f32 0.0, %v1439
        %1441 = vmatmul.f32.gmra.mxu0 %v1397
        %v1442 = vpop.f32.mrf.mxu0
        %v1443 = vadd.f32 0.0, %v1442
        %1444 = vmatmul.f32.gmra.mxu0 %v1398
        %v1445 = vpop.f32.mrf.mxu0
        %v1446 = vadd.f32 0.0, %v1445
        %1447 = vmatmul.f32.gmra.mxu0 %v1399
        %v1448 = vpop.f32.mrf.mxu0
        %v1449 = vadd.f32 0.0, %v1448
        %1450 = vmatmul.f32.gmra.mxu0 %v1400
        %v1451 = vpop.f32.mrf.mxu0
        %v1452 = vadd.f32 0.0, %v1451
        %1453 = vmatmul.f32.gmra.mxu0 %v1401
        %v1454 = vpop.f32.mrf.mxu0
        %v1455 = vadd.f32 0.0, %v1454
        %1456 = vmatmul.f32.gmra.mxu0 %v1402
        %v1457 = vpop.f32.mrf.mxu0
        %v1458 = vadd.f32 0.0, %v1457
        %1459 = vmatmul.f32.gmra.mxu0 %v1403
        %v1460 = vpop.f32.mrf.mxu0
        %v1461 = vadd.f32 0.0, %v1460
        %1462 = vmatmul.f32.gmra.mxu0 %v1404
        %v1463 = vpop.f32.mrf.mxu0
        %v1464 = vadd.f32 0.0, %v1463
        %1465 = vmatmul.f32.gmra.mxu0 %v1405
        %v1466 = vpop.f32.mrf.mxu0
        %v1467 = vadd.f32 0.0, %v1466
        %1468 = vmatmul.f32.gmra.mxu0 %v1406
        %v1469 = vpop.f32.mrf.mxu0
        %v1470 = vadd.f32 0.0, %v1469
        %1471 = vdwg.mxu0
        %1476 = vrot.lane.b32.xlu0 %v1437, 32
        %v1477 = vpop.permute.xlu0 %1476
        %1478 = vrot.lane.b32.xlu0 %v1440, 32
        %v1479 = vpop.permute.xlu0 %1478
        %1480 = vrot.lane.b32.xlu0 %v1443, 32
        %v1481 = vpop.permute.xlu0 %1480
        %1482 = vrot.lane.b32.xlu0 %v1446, 32
        %v1483 = vpop.permute.xlu0 %1482
        %1492 = vrot.lane.b32.xlu0 %v1449, 64
        %v1493 = vpop.permute.xlu0 %1492
        %1494 = vrot.lane.b32.xlu0 %v1452, 64
        %v1495 = vpop.permute.xlu0 %1494
        %1496 = vrot.lane.b32.xlu0 %v1455, 64
        %v1497 = vpop.permute.xlu0 %1496
        %1498 = vrot.lane.b32.xlu0 %v1458, 64
        %v1499 = vpop.permute.xlu0 %1498
        %1508 = vrot.lane.b32.xlu0 %v1461, 96
        %v1509 = vpop.permute.xlu0 %1508
        %1510 = vrot.lane.b32.xlu0 %v1464, 96
        %v1511 = vpop.permute.xlu0 %1510
        %1512 = vrot.lane.b32.xlu0 %v1467, 96
        %v1513 = vpop.permute.xlu0 %1512
        %1514 = vrot.lane.b32.xlu0 %v1470, 96
        %v1515 = vpop.permute.xlu0 %1514
        %v1520 = vsel %vm1085, %v1425, %v1477
        %v1521 = vsel %vm1085, %v1428, %v1479
        %v1522 = vsel %vm1085, %v1431, %v1481
        %v1523 = vsel %vm1085, %v1434, %v1483
        %vm1524 = vcmask 523264
        %v1525 = vsel %vm1524, %v1520, %v1493
        %v1526 = vsel %vm1524, %v1521, %v1495
        %v1527 = vsel %vm1524, %v1522, %v1497
        %v1528 = vsel %vm1524, %v1523, %v1499
        %vm1529 = vcmask 785408
        %v1530 = vsel %vm1529, %v1525, %v1509
        %v1531 = vsel %vm1529, %v1526, %v1511
        %v1532 = vsel %vm1529, %v1527, %v1513
        %v1533 = vsel %vm1529, %v1528, %v1515
        %v1534 = vld [vmem:[%s721] sm:$0xff]
        %v1535 = vld [vmem:[%s721 + $0x8] sm:$0xff]
        %v1536 = vld [vmem:[%s721 + $0x10] sm:$0xff]
        %v1537 = vld [vmem:[%s721 + $0x18] sm:$0xff]
        %v1538 = vld [vmem:[%s721 + $0x20] sm:$0xff]
        %v1539 = vld [vmem:[%s721 + $0x28] sm:$0xff]
        %v1540 = vld [vmem:[%s721 + $0x30] sm:$0xff]
        %v1541 = vld [vmem:[%s721 + $0x38] sm:$0xff]
        %v1542 = vld [vmem:[%s721 + $0x40] sm:$0xff]
        %v1543 = vld [vmem:[%s721 + $0x48] sm:$0xff]
        %v1544 = vld [vmem:[%s721 + $0x50] sm:$0xff]
        %v1545 = vld [vmem:[%s721 + $0x58] sm:$0xff]
        %v1546 = vld [vmem:[%s721 + $0x60] sm:$0xff]
        %v1547 = vld [vmem:[%s721 + $0x68] sm:$0xff]
        %v1548 = vld [vmem:[%s721 + $0x70] sm:$0xff]
        %v1549 = vld [vmem:[%s721 + $0x78] sm:$0xff]
        %1550 = vmatpush.msra.mxu0 %v1549
        %1551 = vmatpush.msra.mxu0 %v1548
        %1552 = vmatpush.msra.mxu0 %v1547
        %1553 = vmatpush.msra.mxu0 %v1546
        %1554 = vmatpush.msra.mxu0 %v1545
        %1555 = vmatpush.msra.mxu0 %v1544
        %1556 = vmatpush.msra.mxu0 %v1543
        %1557 = vmatpush.msra.mxu0 %v1542
        %1558 = vmatpush.msra.mxu0 %v1541
        %1559 = vmatpush.msra.mxu0 %v1540
        %1560 = vmatpush.msra.mxu0 %v1539
        %1561 = vmatpush.msra.mxu0 %v1538
        %1562 = vmatpush.msra.mxu0 %v1537
        %1563 = vmatpush.msra.mxu0 %v1536
        %1564 = vmatpush.msra.mxu0 %v1535
        %1565 = vmatpush.msra.mxu0 %v1534
        %1566 = vmatmul.f32.gmra.mxu0 %v1530
        %v1567 = vpop.f32.mrf.mxu0
        %v1568 = vadd.f32 0.0, %v1567
        %1569 = vmatmul.f32.gmra.mxu0 %v1531
        %v1570 = vpop.f32.mrf.mxu0
        %v1571 = vadd.f32 0.0, %v1570
        %1572 = vmatmul.f32.gmra.mxu0 %v1532
        %v1573 = vpop.f32.mrf.mxu0
        %v1574 = vadd.f32 0.0, %v1573
        %1575 = vmatmul.f32.gmra.mxu0 %v1533
        %v1576 = vpop.f32.mrf.mxu0
        %v1577 = vadd.f32 0.0, %v1576
        %1578 = vdwg.mxu0
        %v1579 = vadd.f32 %v747, %v1568
        %v1580 = vadd.f32 %v748, %v1571
        %v1581 = vadd.f32 %v749, %v1574
        %v1582 = vadd.f32 %v750, %v1577
        %v1583 = vld [vmem:[%s724] sm:$0x1]
        %v1584 = vld [vmem:[%s727] sm:$0x1]
        %1585 = vadd.xlane.f32.xlu0 %v1579
        %v1586 = vpop.xlane.xlu0 %1585
        %1587 = vadd.xlane.f32.xlu0 %v1580
        %v1588 = vpop.xlane.xlu0 %1587
        %1589 = vadd.xlane.f32.xlu0 %v1581
        %v1590 = vpop.xlane.xlu0 %1589
        %1591 = vadd.xlane.f32.xlu0 %v1582
        %v1592 = vpop.xlane.xlu0 %1591
        %v1593 = vmul.f32 %v1586, %v767
        %v1594 = vmul.f32 %v1588, %v767
        %v1595 = vmul.f32 %v1590, %v767
        %v1596 = vmul.f32 %v1592, %v767
        %v1597 = vsub.f32 %v1579, %v1593
        %v1598 = vsub.f32 %v1580, %v1594
        %v1599 = vsub.f32 %v1581, %v1595
        %v1600 = vsub.f32 %v1582, %v1596
        %v1601 = vmul.f32 %v1597, %v1597
        %v1602 = vmul.f32 %v1598, %v1598
        %v1603 = vmul.f32 %v1599, %v1599
        %v1604 = vmul.f32 %v1600, %v1600
        %1605 = vadd.xlane.f32.xlu0 %v1601
        %v1606 = vpop.xlane.xlu0 %1605
        %1607 = vadd.xlane.f32.xlu0 %v1602
        %v1608 = vpop.xlane.xlu0 %1607
        %1609 = vadd.xlane.f32.xlu0 %v1603
        %v1610 = vpop.xlane.xlu0 %1609
        %1611 = vadd.xlane.f32.xlu0 %v1604
        %v1612 = vpop.xlane.xlu0 %1611
        %v1613 = vmul.f32 %v1606, %v767
        %v1614 = vmul.f32 %v1608, %v767
        %v1615 = vmul.f32 %v1610, %v767
        %v1616 = vmul.f32 %v1612, %v767
        %v1617 = vadd.f32 %v1613, 1e-05
        %v1618 = vadd.f32 %v1614, 1e-05
        %v1619 = vadd.f32 %v1615, 1e-05
        %v1620 = vadd.f32 %v1616, 1e-05
        %v1621 = vrsqrt.pop %v1617
        %v1622 = vmul.f32 %v1621, %v1617
        %v1623 = vmul.f32 %v1622, %v1621
        %v1624 = vmul.f32 0.5, %v1623
        %v1625 = vsub.f32 1.5, %v1624
        %v1626 = vmul.f32 %v1621, %v1625
        %vm1627 = vweird.f32 %v1617
        %vm1628 = vweird.f32 %v1621
        %vm1629 = vmor %vm1627, %vm1628
        %v1630 = vsel %vm1629, %v1621, %v1626
        %v1631 = vrsqrt.pop %v1618
        %v1632 = vmul.f32 %v1631, %v1618
        %v1633 = vmul.f32 %v1632, %v1631
        %v1634 = vmul.f32 0.5, %v1633
        %v1635 = vsub.f32 1.5, %v1634
        %v1636 = vmul.f32 %v1631, %v1635
        %vm1637 = vweird.f32 %v1618
        %vm1638 = vweird.f32 %v1631
        %vm1639 = vmor %vm1637, %vm1638
        %v1640 = vsel %vm1639, %v1631, %v1636
        %v1641 = vrsqrt.pop %v1619
        %v1642 = vmul.f32 %v1641, %v1619
        %v1643 = vmul.f32 %v1642, %v1641
        %v1644 = vmul.f32 0.5, %v1643
        %v1645 = vsub.f32 1.5, %v1644
        %v1646 = vmul.f32 %v1641, %v1645
        %vm1647 = vweird.f32 %v1619
        %vm1648 = vweird.f32 %v1641
        %vm1649 = vmor %vm1647, %vm1648
        %v1650 = vsel %vm1649, %v1641, %v1646
        %v1651 = vrsqrt.pop %v1620
        %v1652 = vmul.f32 %v1651, %v1620
        %v1653 = vmul.f32 %v1652, %v1651
        %v1654 = vmul.f32 0.5, %v1653
        %v1655 = vsub.f32 1.5, %v1654
        %v1656 = vmul.f32 %v1651, %v1655
        %vm1657 = vweird.f32 %v1620
        %vm1658 = vweird.f32 %v1651
        %vm1659 = vmor %vm1657, %vm1658
        %v1660 = vsel %vm1659, %v1651, %v1656
        %v1661 = vmul.f32 %v1597, %v1630
        %v1662 = vmul.f32 %v1598, %v1640
        %v1663 = vmul.f32 %v1599, %v1650
        %v1664 = vmul.f32 %v1600, %v1660
        %v1666 = vperm.slane %v1583, 0
        %v1668 = vmul.f32 %v1661, %v1666
        %v1669 = vmul.f32 %v1662, %v1666
        %v1670 = vmul.f32 %v1663, %v1666
        %v1671 = vmul.f32 %v1664, %v1666
        %v1673 = vperm.slane %v1584, 0
        %v1675 = vadd.f32 %v1668, %v1673
        %v1676 = vadd.f32 %v1669, %v1673
        %v1677 = vadd.f32 %v1670, %v1673
        %v1678 = vadd.f32 %v1671, %v1673
        %v1679 = vld [vmem:[%s617] sm:$0xff]
        %v1680 = vld [vmem:[%s617 + $0x8] sm:$0xff]
        %v1681 = vld [vmem:[%s617 + $0x10] sm:$0xff]
        %v1682 = vld [vmem:[%s617 + $0x18] sm:$0xff]
        %v1683 = vld [vmem:[%s617 + $0x20] sm:$0xff]
        %v1684 = vld [vmem:[%s617 + $0x28] sm:$0xff]
        %v1685 = vld [vmem:[%s617 + $0x30] sm:$0xff]
        %v1686 = vld [vmem:[%s617 + $0x38] sm:$0xff]
        %v1687 = vld [vmem:[%s617 + $0x40] sm:$0xff]
        %v1688 = vld [vmem:[%s617 + $0x48] sm:$0xff]
        %v1689 = vld [vmem:[%s617 + $0x50] sm:$0xff]
        %v1690 = vld [vmem:[%s617 + $0x58] sm:$0xff]
        %v1691 = vld [vmem:[%s617 + $0x60] sm:$0xff]
        %v1692 = vld [vmem:[%s617 + $0x68] sm:$0xff]
        %v1693 = vld [vmem:[%s617 + $0x70] sm:$0xff]
        %v1694 = vld [vmem:[%s617 + $0x78] sm:$0xff]
        %v1695 = vld [vmem:[%s617 + $0x80] sm:$0xff]
        %v1696 = vld [vmem:[%s617 + $0x88] sm:$0xff]
        %v1697 = vld [vmem:[%s617 + $0x90] sm:$0xff]
        %v1698 = vld [vmem:[%s617 + $0x98] sm:$0xff]
        %v1699 = vld [vmem:[%s617 + $0xa0] sm:$0xff]
        %v1700 = vld [vmem:[%s617 + $0xa8] sm:$0xff]
        %v1701 = vld [vmem:[%s617 + $0xb0] sm:$0xff]
        %v1702 = vld [vmem:[%s617 + $0xb8] sm:$0xff]
        %v1703 = vld [vmem:[%s617 + $0xc0] sm:$0xff]
        %v1704 = vld [vmem:[%s617 + $0xc8] sm:$0xff]
        %v1705 = vld [vmem:[%s617 + $0xd0] sm:$0xff]
        %v1706 = vld [vmem:[%s617 + $0xd8] sm:$0xff]
        %v1707 = vld [vmem:[%s617 + $0xe0] sm:$0xff]
        %v1708 = vld [vmem:[%s617 + $0xe8] sm:$0xff]
        %v1709 = vld [vmem:[%s617 + $0xf0] sm:$0xff]
        %v1710 = vld [vmem:[%s617 + $0xf8] sm:$0xff]
        %v1711 = vld [vmem:[%s617 + $0x100] sm:$0xff]
        %v1712 = vld [vmem:[%s617 + $0x108] sm:$0xff]
        %v1713 = vld [vmem:[%s617 + $0x110] sm:$0xff]
        %v1714 = vld [vmem:[%s617 + $0x118] sm:$0xff]
        %v1715 = vld [vmem:[%s617 + $0x120] sm:$0xff]
        %v1716 = vld [vmem:[%s617 + $0x128] sm:$0xff]
        %v1717 = vld [vmem:[%s617 + $0x130] sm:$0xff]
        %v1718 = vld [vmem:[%s617 + $0x138] sm:$0xff]
        %v1719 = vld [vmem:[%s617 + $0x140] sm:$0xff]
        %v1720 = vld [vmem:[%s617 + $0x148] sm:$0xff]
        %v1721 = vld [vmem:[%s617 + $0x150] sm:$0xff]
        %v1722 = vld [vmem:[%s617 + $0x158] sm:$0xff]
        %v1723 = vld [vmem:[%s617 + $0x160] sm:$0xff]
        %v1724 = vld [vmem:[%s617 + $0x168] sm:$0xff]
        %v1725 = vld [vmem:[%s617 + $0x170] sm:$0xff]
        %v1726 = vld [vmem:[%s617 + $0x178] sm:$0xff]
        %v1727 = vld [vmem:[%s617 + $0x180] sm:$0xff]
        %v1728 = vld [vmem:[%s617 + $0x188] sm:$0xff]
        %v1729 = vld [vmem:[%s617 + $0x190] sm:$0xff]
        %v1730 = vld [vmem:[%s617 + $0x198] sm:$0xff]
        %v1731 = vld [vmem:[%s617 + $0x1a0] sm:$0xff]
        %v1732 = vld [vmem:[%s617 + $0x1a8] sm:$0xff]
        %v1733 = vld [vmem:[%s617 + $0x1b0] sm:$0xff]
        %v1734 = vld [vmem:[%s617 + $0x1b8] sm:$0xff]
        %v1735 = vld [vmem:[%s617 + $0x1c0] sm:$0xff]
        %v1736 = vld [vmem:[%s617 + $0x1c8] sm:$0xff]
        %v1737 = vld [vmem:[%s617 + $0x1d0] sm:$0xff]
        %v1738 = vld [vmem:[%s617 + $0x1d8] sm:$0xff]
        %v1739 = vld [vmem:[%s617 + $0x1e0] sm:$0xff]
        %v1740 = vld [vmem:[%s617 + $0x1e8] sm:$0xff]
        %v1741 = vld [vmem:[%s617 + $0x1f0] sm:$0xff]
        %v1742 = vld [vmem:[%s617 + $0x1f8] sm:$0xff]
        %v1743 = vld [vmem:[%s731] sm:$0xf]
        %v1745 = vperm.slane %v1743, 0
        %v1746 = vperm.slane %v1743, 1
        %v1747 = vperm.slane %v1743, 2
        %v1748 = vperm.slane %v1743, 3
        %1753 = vmatpush.msra.mxu0 %v1739
        %1754 = vmatpush.msra.mxu0 %v1735
        %1755 = vmatpush.msra.mxu0 %v1731
        %1756 = vmatpush.msra.mxu0 %v1727
        %1757 = vmatpush.msra.mxu0 %v1723
        %1758 = vmatpush.msra.mxu0 %v1719
        %1759 = vmatpush.msra.mxu0 %v1715
        %1760 = vmatpush.msra.mxu0 %v1711
        %1761 = vmatpush.msra.mxu0 %v1707
        %1762 = vmatpush.msra.mxu0 %v1703
        %1763 = vmatpush.msra.mxu0 %v1699
        %1764 = vmatpush.msra.mxu0 %v1695
        %1765 = vmatpush.msra.mxu0 %v1691
        %1766 = vmatpush.msra.mxu0 %v1687
        %1767 = vmatpush.msra.mxu0 %v1683
        %1768 = vmatpush.msra.mxu0 %v1679
        %1769 = vmatmul.f32.gmra.mxu0 %v1675
        %v1770 = vpop.f32.mrf.mxu0
        %v1771 = vadd.f32 %v1745, %v1770
        %1772 = vmatmul.f32.gmra.mxu0 %v1676
        %v1773 = vpop.f32.mrf.mxu0
        %v1774 = vadd.f32 %v1745, %v1773
        %1775 = vmatmul.f32.gmra.mxu0 %v1677
        %v1776 = vpop.f32.mrf.mxu0
        %v1777 = vadd.f32 %v1745, %v1776
        %1778 = vmatmul.f32.gmra.mxu0 %v1678
        %v1779 = vpop.f32.mrf.mxu0
        %v1780 = vadd.f32 %v1745, %v1779
        %1781 = vdwg.mxu0
        %1782 = vmatpush.msra.mxu0 %v1740
        %1783 = vmatpush.msra.mxu0 %v1736
        %1784 = vmatpush.msra.mxu0 %v1732
        %1785 = vmatpush.msra.mxu0 %v1728
        %1786 = vmatpush.msra.mxu0 %v1724
        %1787 = vmatpush.msra.mxu0 %v1720
        %1788 = vmatpush.msra.mxu0 %v1716
        %1789 = vmatpush.msra.mxu0 %v1712
        %1790 = vmatpush.msra.mxu0 %v1708
        %1791 = vmatpush.msra.mxu0 %v1704
        %1792 = vmatpush.msra.mxu0 %v1700
        %1793 = vmatpush.msra.mxu0 %v1696
        %1794 = vmatpush.msra.mxu0 %v1692
        %1795 = vmatpush.msra.mxu0 %v1688
        %1796 = vmatpush.msra.mxu0 %v1684
        %1797 = vmatpush.msra.mxu0 %v1680
        %1798 = vmatmul.f32.gmra.mxu0 %v1675
        %v1799 = vpop.f32.mrf.mxu0
        %v1800 = vadd.f32 %v1746, %v1799
        %1801 = vmatmul.f32.gmra.mxu0 %v1676
        %v1802 = vpop.f32.mrf.mxu0
        %v1803 = vadd.f32 %v1746, %v1802
        %1804 = vmatmul.f32.gmra.mxu0 %v1677
        %v1805 = vpop.f32.mrf.mxu0
        %v1806 = vadd.f32 %v1746, %v1805
        %1807 = vmatmul.f32.gmra.mxu0 %v1678
        %v1808 = vpop.f32.mrf.mxu0
        %v1809 = vadd.f32 %v1746, %v1808
        %1810 = vdwg.mxu0
        %1811 = vmatpush.msra.mxu0 %v1741
        %1812 = vmatpush.msra.mxu0 %v1737
        %1813 = vmatpush.msra.mxu0 %v1733
        %1814 = vmatpush.msra.mxu0 %v1729
        %1815 = vmatpush.msra.mxu0 %v1725
        %1816 = vmatpush.msra.mxu0 %v1721
        %1817 = vmatpush.msra.mxu0 %v1717
        %1818 = vmatpush.msra.mxu0 %v1713
        %1819 = vmatpush.msra.mxu0 %v1709
        %1820 = vmatpush.msra.mxu0 %v1705
        %1821 = vmatpush.msra.mxu0 %v1701
        %1822 = vmatpush.msra.mxu0 %v1697
        %1823 = vmatpush.msra.mxu0 %v1693
        %1824 = vmatpush.msra.mxu0 %v1689
        %1825 = vmatpush.msra.mxu0 %v1685
        %1826 = vmatpush.msra.mxu0 %v1681
        %1827 = vmatmul.f32.gmra.mxu0 %v1675
        %v1828 = vpop.f32.mrf.mxu0
        %v1829 = vadd.f32 %v1747, %v1828
        %1830 = vmatmul.f32.gmra.mxu0 %v1676
        %v1831 = vpop.f32.mrf.mxu0
        %v1832 = vadd.f32 %v1747, %v1831
        %1833 = vmatmul.f32.gmra.mxu0 %v1677
        %v1834 = vpop.f32.mrf.mxu0
        %v1835 = vadd.f32 %v1747, %v1834
        %1836 = vmatmul.f32.gmra.mxu0 %v1678
        %v1837 = vpop.f32.mrf.mxu0
        %v1838 = vadd.f32 %v1747, %v1837
        %1839 = vdwg.mxu0
        %1840 = vmatpush.msra.mxu0 %v1742
        %1841 = vmatpush.msra.mxu0 %v1738
        %1842 = vmatpush.msra.mxu0 %v1734
        %1843 = vmatpush.msra.mxu0 %v1730
        %1844 = vmatpush.msra.mxu0 %v1726
        %1845 = vmatpush.msra.mxu0 %v1722
        %1846 = vmatpush.msra.mxu0 %v1718
        %1847 = vmatpush.msra.mxu0 %v1714
        %1848 = vmatpush.msra.mxu0 %v1710
        %1849 = vmatpush.msra.mxu0 %v1706
        %1850 = vmatpush.msra.mxu0 %v1702
        %1851 = vmatpush.msra.mxu0 %v1698
        %1852 = vmatpush.msra.mxu0 %v1694
        %1853 = vmatpush.msra.mxu0 %v1690
        %1854 = vmatpush.msra.mxu0 %v1686
        %1855 = vmatpush.msra.mxu0 %v1682
        %1856 = vmatmul.f32.gmra.mxu0 %v1675
        %v1857 = vpop.f32.mrf.mxu0
        %v1858 = vadd.f32 %v1748, %v1857
        %1859 = vmatmul.f32.gmra.mxu0 %v1676
        %v1860 = vpop.f32.mrf.mxu0
        %v1861 = vadd.f32 %v1748, %v1860
        %1862 = vmatmul.f32.gmra.mxu0 %v1677
        %v1863 = vpop.f32.mrf.mxu0
        %v1864 = vadd.f32 %v1748, %v1863
        %1865 = vmatmul.f32.gmra.mxu0 %v1678
        %v1866 = vpop.f32.mrf.mxu0
        %v1867 = vadd.f32 %v1748, %v1866
        %1868 = vdwg.mxu0
        %v1869 = vmul.f32 %v1771, %v1771
        %v1870 = vmul.f32 %v1800, %v1800
        %v1871 = vmul.f32 %v1829, %v1829
        %v1872 = vmul.f32 %v1858, %v1858
        %v1873 = vmul.f32 %v1774, %v1774
        %v1874 = vmul.f32 %v1803, %v1803
        %v1875 = vmul.f32 %v1832, %v1832
        %v1876 = vmul.f32 %v1861, %v1861
        %v1877 = vmul.f32 %v1777, %v1777
        %v1878 = vmul.f32 %v1806, %v1806
        %v1879 = vmul.f32 %v1835, %v1835
        %v1880 = vmul.f32 %v1864, %v1864
        %v1881 = vmul.f32 %v1780, %v1780
        %v1882 = vmul.f32 %v1809, %v1809
        %v1883 = vmul.f32 %v1838, %v1838
        %v1884 = vmul.f32 %v1867, %v1867
        %v1885 = vmul.f32 %v1771, %v1869
        %v1886 = vmul.f32 %v1800, %v1870
        %v1887 = vmul.f32 %v1829, %v1871
        %v1888 = vmul.f32 %v1858, %v1872
        %v1889 = vmul.f32 %v1774, %v1873
        %v1890 = vmul.f32 %v1803, %v1874
        %v1891 = vmul.f32 %v1832, %v1875
        %v1892 = vmul.f32 %v1861, %v1876
        %v1893 = vmul.f32 %v1777, %v1877
        %v1894 = vmul.f32 %v1806, %v1878
        %v1895 = vmul.f32 %v1835, %v1879
        %v1896 = vmul.f32 %v1864, %v1880
        %v1897 = vmul.f32 %v1780, %v1881
        %v1898 = vmul.f32 %v1809, %v1882
        %v1899 = vmul.f32 %v1838, %v1883
        %v1900 = vmul.f32 %v1867, %v1884
        %v1901 = vmul.f32 %v1885, 0.044715
        %v1902 = vmul.f32 %v1886, 0.044715
        %v1903 = vmul.f32 %v1887, 0.044715
        %v1904 = vmul.f32 %v1888, 0.044715
        %v1905 = vmul.f32 %v1889, 0.044715
        %v1906 = vmul.f32 %v1890, 0.044715
        %v1907 = vmul.f32 %v1891, 0.044715
        %v1908 = vmul.f32 %v1892, 0.044715
        %v1909 = vmul.f32 %v1893, 0.044715
        %v1910 = vmul.f32 %v1894, 0.044715
        %v1911 = vmul.f32 %v1895, 0.044715
        %v1912 = vmul.f32 %v1896, 0.044715
        %v1913 = vmul.f32 %v1897, 0.044715
        %v1914 = vmul.f32 %v1898, 0.044715
        %v1915 = vmul.f32 %v1899, 0.044715
        %v1916 = vmul.f32 %v1900, 0.044715
        %v1917 = vadd.f32 %v1771, %v1901
        %v1918 = vadd.f32 %v1800, %v1902
        %v1919 = vadd.f32 %v1829, %v1903
        %v1920 = vadd.f32 %v1858, %v1904
        %v1921 = vadd.f32 %v1774, %v1905
        %v1922 = vadd.f32 %v1803, %v1906
        %v1923 = vadd.f32 %v1832, %v1907
        %v1924 = vadd.f32 %v1861, %v1908
        %v1925 = vadd.f32 %v1777, %v1909
        %v1926 = vadd.f32 %v1806, %v1910
        %v1927 = vadd.f32 %v1835, %v1911
        %v1928 = vadd.f32 %v1864, %v1912
        %v1929 = vadd.f32 %v1780, %v1913
        %v1930 = vadd.f32 %v1809, %v1914
        %v1931 = vadd.f32 %v1838, %v1915
        %v1932 = vadd.f32 %v1867, %v1916
        %v1933 = vmul.f32 %v1917, 0.7978846
        %v1934 = vmul.f32 %v1918, 0.7978846
        %v1935 = vmul.f32 %v1919, 0.7978846
        %v1936 = vmul.f32 %v1920, 0.7978846
        %v1937 = vmul.f32 %v1921, 0.7978846
        %v1938 = vmul.f32 %v1922, 0.7978846
        %v1939 = vmul.f32 %v1923, 0.7978846
        %v1940 = vmul.f32 %v1924, 0.7978846
        %v1941 = vmul.f32 %v1925, 0.7978846
        %v1942 = vmul.f32 %v1926, 0.7978846
        %v1943 = vmul.f32 %v1927, 0.7978846
        %v1944 = vmul.f32 %v1928, 0.7978846
        %v1945 = vmul.f32 %v1929, 0.7978846
        %v1946 = vmul.f32 %v1930, 0.7978846
        %v1947 = vmul.f32 %v1931, 0.7978846
        %v1948 = vmul.f32 %v1932, 0.7978846
        %v1949 = vtanh.pop %v1933
        %v1950 = vtanh.pop %v1934
        %v1951 = vtanh.pop %v1935
        %v1952 = vtanh.pop %v1936
        %v1953 = vtanh.pop %v1937
        %v1954 = vtanh.pop %v1938
        %v1955 = vtanh.pop %v1939
        %v1956 = vtanh.pop %v1940
        %v1957 = vtanh.pop %v1941
        %v1958 = vtanh.pop %v1942
        %v1959 = vtanh.pop %v1943
        %v1960 = vtanh.pop %v1944
        %v1961 = vtanh.pop %v1945
        %v1962 = vtanh.pop %v1946
        %v1963 = vtanh.pop %v1947
        %v1964 = vtanh.pop %v1948
        %v1965 = vadd.f32 %v1949, 1.0
        %v1966 = vadd.f32 %v1950, 1.0
        %v1967 = vadd.f32 %v1951, 1.0
        %v1968 = vadd.f32 %v1952, 1.0
        %v1969 = vadd.f32 %v1953, 1.0
        %v1970 = vadd.f32 %v1954, 1.0
        %v1971 = vadd.f32 %v1955, 1.0
        %v1972 = vadd.f32 %v1956, 1.0
        %v1973 = vadd.f32 %v1957, 1.0
        %v1974 = vadd.f32 %v1958, 1.0
        %v1975 = vadd.f32 %v1959, 1.0
        %v1976 = vadd.f32 %v1960, 1.0
        %v1977 = vadd.f32 %v1961, 1.0
        %v1978 = vadd.f32 %v1962, 1.0
        %v1979 = vadd.f32 %v1963, 1.0
        %v1980 = vadd.f32 %v1964, 1.0
        %v1981 = vmul.f32 %v1965, 0.5
        %v1982 = vmul.f32 %v1966, 0.5
        %v1983 = vmul.f32 %v1967, 0.5
        %v1984 = vmul.f32 %v1968, 0.5
        %v1985 = vmul.f32 %v1969, 0.5
        %v1986 = vmul.f32 %v1970, 0.5
        %v1987 = vmul.f32 %v1971, 0.5
        %v1988 = vmul.f32 %v1972, 0.5
        %v1989 = vmul.f32 %v1973, 0.5
        %v1990 = vmul.f32 %v1974, 0.5
        %v1991 = vmul.f32 %v1975, 0.5
        %v1992 = vmul.f32 %v1976, 0.5
        %v1993 = vmul.f32 %v1977, 0.5
        %v1994 = vmul.f32 %v1978, 0.5
        %v1995 = vmul.f32 %v1979, 0.5
        %v1996 = vmul.f32 %v1980, 0.5
        %v1997 = vmul.f32 %v1771, %v1981
        %v1998 = vmul.f32 %v1800, %v1982
        %v1999 = vmul.f32 %v1829, %v1983
        %v2000 = vmul.f32 %v1858, %v1984
        %v2001 = vmul.f32 %v1774, %v1985
        %v2002 = vmul.f32 %v1803, %v1986
        %v2003 = vmul.f32 %v1832, %v1987
        %v2004 = vmul.f32 %v1861, %v1988
        %v2005 = vmul.f32 %v1777, %v1989
        %v2006 = vmul.f32 %v1806, %v1990
        %v2007 = vmul.f32 %v1835, %v1991
        %v2008 = vmul.f32 %v1864, %v1992
        %v2009 = vmul.f32 %v1780, %v1993
        %v2010 = vmul.f32 %v1809, %v1994
        %v2011 = vmul.f32 %v1838, %v1995
        %v2012 = vmul.f32 %v1867, %v1996
        %v2013 = vld [vmem:[%s627] sm:$0xff]
        %v2014 = vld [vmem:[%s627 + $0x8] sm:$0xff]
        %v2015 = vld [vmem:[%s627 + $0x10] sm:$0xff]
        %v2016 = vld [vmem:[%s627 + $0x18] sm:$0xff]
        %v2017 = vld [vmem:[%s627 + $0x20] sm:$0xff]
        %v2018 = vld [vmem:[%s627 + $0x28] sm:$0xff]
        %v2019 = vld [vmem:[%s627 + $0x30] sm:$0xff]
        %v2020 = vld [vmem:[%s627 + $0x38] sm:$0xff]
        %v2021 = vld [vmem:[%s627 + $0x40] sm:$0xff]
        %v2022 = vld [vmem:[%s627 + $0x48] sm:$0xff]
        %v2023 = vld [vmem:[%s627 + $0x50] sm:$0xff]
        %v2024 = vld [vmem:[%s627 + $0x58] sm:$0xff]
        %v2025 = vld [vmem:[%s627 + $0x60] sm:$0xff]
        %v2026 = vld [vmem:[%s627 + $0x68] sm:$0xff]
        %v2027 = vld [vmem:[%s627 + $0x70] sm:$0xff]
        %v2028 = vld [vmem:[%s627 + $0x78] sm:$0xff]
        %v2029 = vld [vmem:[%s627 + $0x80] sm:$0xff]
        %v2030 = vld [vmem:[%s627 + $0x88] sm:$0xff]
        %v2031 = vld [vmem:[%s627 + $0x90] sm:$0xff]
        %v2032 = vld [vmem:[%s627 + $0x98] sm:$0xff]
        %v2033 = vld [vmem:[%s627 + $0xa0] sm:$0xff]
        %v2034 = vld [vmem:[%s627 + $0xa8] sm:$0xff]
        %v2035 = vld [vmem:[%s627 + $0xb0] sm:$0xff]
        %v2036 = vld [vmem:[%s627 + $0xb8] sm:$0xff]
        %v2037 = vld [vmem:[%s627 + $0xc0] sm:$0xff]
        %v2038 = vld [vmem:[%s627 + $0xc8] sm:$0xff]
        %v2039 = vld [vmem:[%s627 + $0xd0] sm:$0xff]
        %v2040 = vld [vmem:[%s627 + $0xd8] sm:$0xff]
        %v2041 = vld [vmem:[%s627 + $0xe0] sm:$0xff]
        %v2042 = vld [vmem:[%s627 + $0xe8] sm:$0xff]
        %v2043 = vld [vmem:[%s627 + $0xf0] sm:$0xff]
        %v2044 = vld [vmem:[%s627 + $0xf8] sm:$0xff]
        %v2045 = vld [vmem:[%s627 + $0x100] sm:$0xff]
        %v2046 = vld [vmem:[%s627 + $0x108] sm:$0xff]
        %v2047 = vld [vmem:[%s627 + $0x110] sm:$0xff]
        %v2048 = vld [vmem:[%s627 + $0x118] sm:$0xff]
        %v2049 = vld [vmem:[%s627 + $0x120] sm:$0xff]
        %v2050 = vld [vmem:[%s627 + $0x128] sm:$0xff]
        %v2051 = vld [vmem:[%s627 + $0x130] sm:$0xff]
        %v2052 = vld [vmem:[%s627 + $0x138] sm:$0xff]
        %v2053 = vld [vmem:[%s627 + $0x140] sm:$0xff]
        %v2054 = vld [vmem:[%s627 + $0x148] sm:$0xff]
        %v2055 = vld [vmem:[%s627 + $0x150] sm:$0xff]
        %v2056 = vld [vmem:[%s627 + $0x158] sm:$0xff]
        %v2057 = vld [vmem:[%s627 + $0x160] sm:$0xff]
        %v2058 = vld [vmem:[%s627 + $0x168] sm:$0xff]
        %v2059 = vld [vmem:[%s627 + $0x170] sm:$0xff]
        %v2060 = vld [vmem:[%s627 + $0x178] sm:$0xff]
        %v2061 = vld [vmem:[%s627 + $0x180] sm:$0xff]
        %v2062 = vld [vmem:[%s627 + $0x188] sm:$0xff]
        %v2063 = vld [vmem:[%s627 + $0x190] sm:$0xff]
        %v2064 = vld [vmem:[%s627 + $0x198] sm:$0xff]
        %v2065 = vld [vmem:[%s627 + $0x1a0] sm:$0xff]
        %v2066 = vld [vmem:[%s627 + $0x1a8] sm:$0xff]
        %v2067 = vld [vmem:[%s627 + $0x1b0] sm:$0xff]
        %v2068 = vld [vmem:[%s627 + $0x1b8] sm:$0xff]
        %v2069 = vld [vmem:[%s627 + $0x1c0] sm:$0xff]
        %v2070 = vld [vmem:[%s627 + $0x1c8] sm:$0xff]
        %v2071 = vld [vmem:[%s627 + $0x1d0] sm:$0xff]
        %v2072 = vld [vmem:[%s627 + $0x1d8] sm:$0xff]
        %v2073 = vld [vmem:[%s627 + $0x1e0] sm:$0xff]
        %v2074 = vld [vmem:[%s627 + $0x1e8] sm:$0xff]
        %v2075 = vld [vmem:[%s627 + $0x1f0] sm:$0xff]
        %v2076 = vld [vmem:[%s627 + $0x1f8] sm:$0xff]
        %2077 = vmatpush.msra.mxu0 %v2028
        %2078 = vmatpush.msra.mxu0 %v2027
        %2079 = vmatpush.msra.mxu0 %v2026
        %2080 = vmatpush.msra.mxu0 %v2025
        %2081 = vmatpush.msra.mxu0 %v2024
        %2082 = vmatpush.msra.mxu0 %v2023
        %2083 = vmatpush.msra.mxu0 %v2022
        %2084 = vmatpush.msra.mxu0 %v2021
        %2085 = vmatpush.msra.mxu0 %v2020
        %2086 = vmatpush.msra.mxu0 %v2019
        %2087 = vmatpush.msra.mxu0 %v2018
        %2088 = vmatpush.msra.mxu0 %v2017
        %2089 = vmatpush.msra.mxu0 %v2016
        %2090 = vmatpush.msra.mxu0 %v2015
        %2091 = vmatpush.msra.mxu0 %v2014
        %2092 = vmatpush.msra.mxu0 %v2013
        %2093 = vmatmul.f32.gmra.mxu0 %v1997
        %v2094 = vpop.f32.mrf.mxu0
        %v2095 = vadd.f32 0.0, %v2094
        %2096 = vmatmul.f32.gmra.mxu0 %v2001
        %v2097 = vpop.f32.mrf.mxu0
        %v2098 = vadd.f32 0.0, %v2097
        %2099 = vmatmul.f32.gmra.mxu0 %v2005
        %v2100 = vpop.f32.mrf.mxu0
        %v2101 = vadd.f32 0.0, %v2100
        %2102 = vmatmul.f32.gmra.mxu0 %v2009
        %v2103 = vpop.f32.mrf.mxu0
        %v2104 = vadd.f32 0.0, %v2103
        %2105 = vdwg.mxu0
        %2106 = vmatpush.msra.mxu0 %v2044
        %2107 = vmatpush.msra.mxu0 %v2043
        %2108 = vmatpush.msra.mxu0 %v2042
        %2109 = vmatpush.msra.mxu0 %v2041
        %2110 = vmatpush.msra.mxu0 %v2040
        %2111 = vmatpush.msra.mxu0 %v2039
        %2112 = vmatpush.msra.mxu0 %v2038
        %2113 = vmatpush.msra.mxu0 %v2037
        %2114 = vmatpush.msra.mxu0 %v2036
        %2115 = vmatpush.msra.mxu0 %v2035
        %2116 = vmatpush.msra.mxu0 %v2034
        %2117 = vmatpush.msra.mxu0 %v2033
        %2118 = vmatpush.msra.mxu0 %v2032
        %2119 = vmatpush.msra.mxu0 %v2031
        %2120 = vmatpush.msra.mxu0 %v2030
        %2121 = vmatpush.msra.mxu0 %v2029
        %2122 = vmatmul.f32.gmra.mxu0 %v1998
        %v2123 = vpop.f32.mrf.mxu0
        %v2124 = vadd.f32 %v2095, %v2123
        %2125 = vmatmul.f32.gmra.mxu0 %v2002
        %v2126 = vpop.f32.mrf.mxu0
        %v2127 = vadd.f32 %v2098, %v2126
        %2128 = vmatmul.f32.gmra.mxu0 %v2006
        %v2129 = vpop.f32.mrf.mxu0
        %v2130 = vadd.f32 %v2101, %v2129
        %2131 = vmatmul.f32.gmra.mxu0 %v2010
        %v2132 = vpop.f32.mrf.mxu0
        %v2133 = vadd.f32 %v2104, %v2132
        %2134 = vdwg.mxu0
        %2135 = vmatpush.msra.mxu0 %v2060
        %2136 = vmatpush.msra.mxu0 %v2059
        %2137 = vmatpush.msra.mxu0 %v2058
        %2138 = vmatpush.msra.mxu0 %v2057
        %2139 = vmatpush.msra.mxu0 %v2056
        %2140 = vmatpush.msra.mxu0 %v2055
        %2141 = vmatpush.msra.mxu0 %v2054
        %2142 = vmatpush.msra.mxu0 %v2053
        %2143 = vmatpush.msra.mxu0 %v2052
        %2144 = vmatpush.msra.mxu0 %v2051
        %2145 = vmatpush.msra.mxu0 %v2050
        %2146 = vmatpush.msra.mxu0 %v2049
        %2147 = vmatpush.msra.mxu0 %v2048
        %2148 = vmatpush.msra.mxu0 %v2047
        %2149 = vmatpush.msra.mxu0 %v2046
        %2150 = vmatpush.msra.mxu0 %v2045
        %2151 = vmatmul.f32.gmra.mxu0 %v1999
        %v2152 = vpop.f32.mrf.mxu0
        %v2153 = vadd.f32 %v2124, %v2152
        %2154 = vmatmul.f32.gmra.mxu0 %v2003
        %v2155 = vpop.f32.mrf.mxu0
        %v2156 = vadd.f32 %v2127, %v2155
        %2157 = vmatmul.f32.gmra.mxu0 %v2007
        %v2158 = vpop.f32.mrf.mxu0
        %v2159 = vadd.f32 %v2130, %v2158
        %2160 = vmatmul.f32.gmra.mxu0 %v2011
        %v2161 = vpop.f32.mrf.mxu0
        %v2162 = vadd.f32 %v2133, %v2161
        %2163 = vdwg.mxu0
        %2164 = vmatpush.msra.mxu0 %v2076
        %2165 = vmatpush.msra.mxu0 %v2075
        %2166 = vmatpush.msra.mxu0 %v2074
        %2167 = vmatpush.msra.mxu0 %v2073
        %2168 = vmatpush.msra.mxu0 %v2072
        %2169 = vmatpush.msra.mxu0 %v2071
        %2170 = vmatpush.msra.mxu0 %v2070
        %2171 = vmatpush.msra.mxu0 %v2069
        %2172 = vmatpush.msra.mxu0 %v2068
        %2173 = vmatpush.msra.mxu0 %v2067
        %2174 = vmatpush.msra.mxu0 %v2066
        %2175 = vmatpush.msra.mxu0 %v2065
        %2176 = vmatpush.msra.mxu0 %v2064
        %2177 = vmatpush.msra.mxu0 %v2063
        %2178 = vmatpush.msra.mxu0 %v2062
        %2179 = vmatpush.msra.mxu0 %v2061
        %2180 = vmatmul.f32.gmra.mxu0 %v2000
        %v2181 = vpop.f32.mrf.mxu0
        %v2182 = vadd.f32 %v2153, %v2181
        %2183 = vmatmul.f32.gmra.mxu0 %v2004
        %v2184 = vpop.f32.mrf.mxu0
        %v2185 = vadd.f32 %v2156, %v2184
        %2186 = vmatmul.f32.gmra.mxu0 %v2008
        %v2187 = vpop.f32.mrf.mxu0
        %v2188 = vadd.f32 %v2159, %v2187
        %2189 = vmatmul.f32.gmra.mxu0 %v2012
        %v2190 = vpop.f32.mrf.mxu0
        %v2191 = vadd.f32 %v2162, %v2190
        %2192 = vdwg.mxu0
        %v2193 = vadd.f32 %v1579, %v2182
        %v2194 = vadd.f32 %v1580, %v2185
        %v2195 = vadd.f32 %v1581, %v2188
        %v2196 = vadd.f32 %v1582, %v2191
        %v2197 = vld [vmem:[%s734] sm:$0x1]
        %v2199 = vperm.slane %v2197, 0
        %v2201 = vadd.f32 %v2193, %v2199
        %v2202 = vadd.f32 %v2194, %v2199
        %v2203 = vadd.f32 %v2195, %v2199
        %v2204 = vadd.f32 %v2196, %v2199
        %2205 = vst [vmem:[#allocation2] sm:$0xff] %v2201
        %2206 = vst [vmem:[#allocation2 + $0x8] sm:$0xff] %v2202
        %2207 = vst [vmem:[#allocation2 + $0x10] sm:$0xff] %v2203
        %2208 = vst [vmem:[#allocation2 + $0x18] sm:$0xff] %v2204
        %p2209 = scmp.eq.s32.totalorder %s35, 1
        // Predicated region
        $region105: #{transformer_forward.1} parent=83 // pred_check
          %p2210 = pneg %p2209
        $region106: #{transformer_forward.1} parent=83 // pred_check_branch
          %2212 = sbr.rel (%p2210) target = $region108
        $region107: #{transformer_forward.1} parent=83 // pred_region
          %v2213 = vld [vmem:[%s12] sm:$0x1]
          %v2214 = vld [vmem:[%s13] sm:$0x1]
          %2215 = vadd.xlane.f32.xlu0 %v2201
          %v2216 = vpop.xlane.xlu0 %2215
          %2217 = vadd.xlane.f32.xlu0 %v2202
          %v2218 = vpop.xlane.xlu0 %2217
          %2219 = vadd.xlane.f32.xlu0 %v2203
          %v2220 = vpop.xlane.xlu0 %2219
          %2221 = vadd.xlane.f32.xlu0 %v2204
          %v2222 = vpop.xlane.xlu0 %2221
          %v2223 = vmul.f32 %v2216, %v767
          %v2224 = vmul.f32 %v2218, %v767
          %v2225 = vmul.f32 %v2220, %v767
          %v2226 = vmul.f32 %v2222, %v767
          %v2227 = vsub.f32 %v2201, %v2223
          %v2228 = vsub.f32 %v2202, %v2224
          %v2229 = vsub.f32 %v2203, %v2225
          %v2230 = vsub.f32 %v2204, %v2226
          %v2231 = vmul.f32 %v2227, %v2227
          %v2232 = vmul.f32 %v2228, %v2228
          %v2233 = vmul.f32 %v2229, %v2229
          %v2234 = vmul.f32 %v2230, %v2230
          %2235 = vadd.xlane.f32.xlu0 %v2231
          %v2236 = vpop.xlane.xlu0 %2235
          %2237 = vadd.xlane.f32.xlu0 %v2232
          %v2238 = vpop.xlane.xlu0 %2237
          %2239 = vadd.xlane.f32.xlu0 %v2233
          %v2240 = vpop.xlane.xlu0 %2239
          %2241 = vadd.xlane.f32.xlu0 %v2234
          %v2242 = vpop.xlane.xlu0 %2241
          %v2243 = vmul.f32 %v2236, %v767
          %v2244 = vmul.f32 %v2238, %v767
          %v2245 = vmul.f32 %v2240, %v767
          %v2246 = vmul.f32 %v2242, %v767
          %v2247 = vadd.f32 %v2243, 1e-05
          %v2248 = vadd.f32 %v2244, 1e-05
          %v2249 = vadd.f32 %v2245, 1e-05
          %v2250 = vadd.f32 %v2246, 1e-05
          %v2251 = vrsqrt.pop %v2247
          %v2252 = vmul.f32 %v2251, %v2247
          %v2253 = vmul.f32 %v2252, %v2251
          %v2254 = vmul.f32 0.5, %v2253
          %v2255 = vsub.f32 1.5, %v2254
          %v2256 = vmul.f32 %v2251, %v2255
          %vm2257 = vweird.f32 %v2247
          %vm2258 = vweird.f32 %v2251
          %vm2259 = vmor %vm2257, %vm2258
          %v2260 = vsel %vm2259, %v2251, %v2256
          %v2261 = vrsqrt.pop %v2248
          %v2262 = vmul.f32 %v2261, %v2248
          %v2263 = vmul.f32 %v2262, %v2261
          %v2264 = vmul.f32 0.5, %v2263
          %v2265 = vsub.f32 1.5, %v2264
          %v2266 = vmul.f32 %v2261, %v2265
          %vm2267 = vweird.f32 %v2248
          %vm2268 = vweird.f32 %v2261
          %vm2269 = vmor %vm2267, %vm2268
          %v2270 = vsel %vm2269, %v2261, %v2266
          %v2271 = vrsqrt.pop %v2249
          %v2272 = vmul.f32 %v2271, %v2249
          %v2273 = vmul.f32 %v2272, %v2271
          %v2274 = vmul.f32 0.5, %v2273
          %v2275 = vsub.f32 1.5, %v2274
          %v2276 = vmul.f32 %v2271, %v2275
          %vm2277 = vweird.f32 %v2249
          %vm2278 = vweird.f32 %v2271
          %vm2279 = vmor %vm2277, %vm2278
          %v2280 = vsel %vm2279, %v2271, %v2276
          %v2281 = vrsqrt.pop %v2250
          %v2282 = vmul.f32 %v2281, %v2250
          %v2283 = vmul.f32 %v2282, %v2281
          %v2284 = vmul.f32 0.5, %v2283
          %v2285 = vsub.f32 1.5, %v2284
          %v2286 = vmul.f32 %v2281, %v2285
          %vm2287 = vweird.f32 %v2250
          %vm2288 = vweird.f32 %v2281
          %vm2289 = vmor %vm2287, %vm2288
          %v2290 = vsel %vm2289, %v2281, %v2286
          %v2291 = vmul.f32 %v2227, %v2260
          %v2292 = vmul.f32 %v2228, %v2270
          %v2293 = vmul.f32 %v2229, %v2280
          %v2294 = vmul.f32 %v2230, %v2290
          %v2296 = vperm.slane %v2213, 0
          %v2298 = vmul.f32 %v2291, %v2296
          %v2299 = vmul.f32 %v2292, %v2296
          %v2300 = vmul.f32 %v2293, %v2296
          %v2301 = vmul.f32 %v2294, %v2296
          %v2303 = vperm.slane %v2214, 0
          %v2305 = vadd.f32 %v2298, %v2303
          %v2306 = vadd.f32 %v2299, %v2303
          %v2307 = vadd.f32 %v2300, %v2303
          %v2308 = vadd.f32 %v2301, %v2303
          %v2309 = vld [vmem:[#allocation9] sm:$0xff]
          %v2310 = vld [vmem:[#allocation9 + $0x8] sm:$0xff]
          %v2311 = vld [vmem:[#allocation9 + $0x10] sm:$0xff]
          %v2312 = vld [vmem:[#allocation9 + $0x18] sm:$0xff]
          %v2313 = vld [vmem:[#allocation9 + $0x20] sm:$0xff]
          %v2314 = vld [vmem:[#allocation9 + $0x28] sm:$0xff]
          %v2315 = vld [vmem:[#allocation9 + $0x30] sm:$0xff]
          %v2316 = vld [vmem:[#allocation9 + $0x38] sm:$0xff]
          %v2317 = vld [vmem:[#allocation9 + $0x40] sm:$0xff]
          %v2318 = vld [vmem:[#allocation9 + $0x48] sm:$0xff]
          %v2319 = vld [vmem:[#allocation9 + $0x50] sm:$0xff]
          %v2320 = vld [vmem:[#allocation9 + $0x58] sm:$0xff]
          %v2321 = vld [vmem:[#allocation9 + $0x60] sm:$0xff]
          %v2322 = vld [vmem:[#allocation9 + $0x68] sm:$0xff]
          %v2323 = vld [vmem:[#allocation9 + $0x70] sm:$0xff]
          %v2324 = vld [vmem:[#allocation9 + $0x78] sm:$0xff]
          %v2325 = vld [vmem:[%s15] sm:$0x1]
          %v2327 = vperm.slane %v2325, 0
          %2329 = vmatpush.msra.mxu0 %v2324
          %2330 = vmatpush.msra.mxu0 %v2323
          %2331 = vmatpush.msra.mxu0 %v2322
          %2332 = vmatpush.msra.mxu0 %v2321
          %2333 = vmatpush.msra.mxu0 %v2320
          %2334 = vmatpush.msra.mxu0 %v2319
          %2335 = vmatpush.msra.mxu0 %v2318
          %2336 = vmatpush.msra.mxu0 %v2317
          %2337 = vmatpush.msra.mxu0 %v2316
          %2338 = vmatpush.msra.mxu0 %v2315
          %2339 = vmatpush.msra.mxu0 %v2314
          %2340 = vmatpush.msra.mxu0 %v2313
          %2341 = vmatpush.msra.mxu0 %v2312
          %2342 = vmatpush.msra.mxu0 %v2311
          %2343 = vmatpush.msra.mxu0 %v2310
          %2344 = vmatpush.msra.mxu0 %v2309
          %2345 = vmatmul.f32.gmra.mxu0 %v2305
          %v2346 = vpop.f32.mrf.mxu0
          %v2347 = vadd.f32 %v2327, %v2346
          %2348 = vmatmul.f32.gmra.mxu0 %v2306
          %v2349 = vpop.f32.mrf.mxu0
          %v2350 = vadd.f32 %v2327, %v2349
          %2351 = vmatmul.f32.gmra.mxu0 %v2307
          %v2352 = vpop.f32.mrf.mxu0
          %v2353 = vadd.f32 %v2327, %v2352
          %2354 = vmatmul.f32.gmra.mxu0 %v2308
          %v2355 = vpop.f32.mrf.mxu0
          %v2356 = vadd.f32 %v2327, %v2355
          %2357 = vdwg.mxu0
          %2358 = vst [vmem:[#allocation11] sm:$0xff] %v2347
          %2359 = vst [vmem:[#allocation11 + $0x8] sm:$0xff] %v2350
          %2360 = vst [vmem:[#allocation11 + $0x10] sm:$0xff] %v2353
          %2361 = vst [vmem:[#allocation11 + $0x18] sm:$0xff] %v2356
        $region108: #{transformer_forward.1} parent=83 // pred_fallthru
          _
        // Predicated region
        $region109: #{transformer_forward.1} parent=83 // pred_check
          %p2362 = pneg %p434
        $region110: #{transformer_forward.1} parent=83 // pred_check_branch
          %2364 = sbr.rel (%p2362) target = $region112
        $region111: #{transformer_forward.1} parent=83 // pred_region
          %2366 = vsyncadd [#allocation5], 0
          %s2367 = sshll.u32 [#allocation11], 4
          %s2368 = int_to_ptr.vmem [resolvable:$true] %s2367
          %s2369 = sshll.u32 %s16, 4
          %s2370 = int_to_ptr.hbm [resolvable:$true] %s2369
          %2375 = dma.vmem_to_hbm [thread:$0]  %s2368, 512, %s2370, [#allocation5], 128, 128, 8
        $region112: #{transformer_forward.1} parent=83 // pred_fallthru
          _
        // Predicated region
        $region113: #{transformer_forward.1} parent=83 // pred_check
          %p2376 = pneg %p434
        $region114: #{transformer_forward.1} parent=83 // pred_check_branch
          %2378 = sbr.rel (%p2376) target = $region116
        $region115: #{transformer_forward.1} parent=83 // pred_region
          %2380 = dma.done [#allocation5], 512
        $region116: #{transformer_forward.1} parent=83 // pred_fallthru
          _
      $region84: #{transformer_forward.1} parent=5 // pred_fallthru
        _
      %p2381 = scmp.le.s32.totalorder 2, %s30
      // Predicated region
      $region117: #{transformer_forward.1} parent=5 // pred_check
        %p2382 = pneg %p2381
      $region118: #{transformer_forward.1} parent=5 // pred_check_branch
        %2384 = sbr.rel (%p2382) target = $region120
      $region119: #{transformer_forward.1} parent=5 // pred_region
        %s2385 = ssub.s32 %s30, 2
      $region120: #{transformer_forward.1} parent=5 // pred_fallthru
        _
    $region6: #{transformer_forward.1} parent=1 // loop_footer
      %s34 = sadd.s32 1, %s30
    $region7: #{transformer_forward.1} parent=1 // loop_footer_branch
      %29 = sbr.rel target = $region3
    $region8: #{transformer_forward.1} parent=1 // loop_exit
      _
    %2386 = vsyncpa [#allocation4], 1
    %s2387 = scalar_lea.sflag [#allocation4], 1
    %2388 = vsyncpa %s2387, 1
    %2389 = vsyncpa [#allocation7], 1
    %s2390 = scalar_lea.sflag [#allocation7], 1
    %2391 = vsyncpa %s2390, 1
    %2392 = vsyncpa [#allocation10], 1
    %2393 = vsyncpa [#allocation5], 1
    %s2394 = scalar_lea.sflag [#allocation5], 1
    %2395 = vsyncpa %s2394, 1

</llo_original>
